<compile_context>
chip_gen: v7x
topology: tpu7x:2x2x1
jax: 0.10.0
libtpu: 0.0.40
codegen_flags: <defaults>
</compile_context>

<pallas_src>
import functools

import numpy as np
import jax
import jax.numpy as jnp
from jax.experimental import pallas as pl
from jax.experimental.pallas import tpu as pltpu

# LSEBottleneck(c1=4, c2=4, shortcut=True, g=1, e=0.5, local_size=5) on (2,4,16,16)
B, C1, M, N = 2, 4, 16, 16
C2 = 4
C_H = int(C2 * 0.5)          # hidden channels c_ = 2
L = 5                        # local_size
LL = L * L
MN = M * N
LANES = B * MN               # batch folded onto lanes -> 512
BLL = B * LL                 # 50
ADD = True and (C1 == C2)    # residual branch active
BN_EPS = 1e-5
PADC = 8                     # cv1 channel rows padded to one full sublane tile


# ----------------------------------------------------------------------------
# Fused Pallas kernel (single grid step, batch on lanes)
# ----------------------------------------------------------------------------
def _fused_kernel(x_ref, pk_ref, w2_ref, msk_ref, poolT_ref, upsT_ref, o_ref,
                  *, nb, add):
    """Whole LSEBottleneck forward, all batch elements at once.

    x_ref    : (B, C1, MN)      input, channels on sublanes, spatial on lanes
    pk_ref   : (PADC, 16)       packed small params (BN-folded weights/biases/alphas)
    w2_ref   : (C2, 9*PADC)     3x3 conv weight, im2col layout, BN-scaled, bf16
    msk_ref  : (9*PADC, B*MN)   per-tap zero-padding masks, pre-broadcast, batch-tiled
    poolT_ref: (B*MN, B*LL)     block-diagonal adaptive avg-pool matrix (transposed)
    upsT_ref : (B*LL, B*MN)     block-diagonal adaptive upsample matrix (transposed)
    o_ref    : (B, C2, MN)
    """
    # Fold batch onto lanes: two static loads + one 128-aligned lane concat.
    x = jnp.concatenate([x_ref[b] for b in range(nb)], axis=1)       # (C1, LANES)

    # ---- unpack the tiny packed parameters (static slices of one vreg) ----
    w1p = pk_ref[:, 0:C1]                          # (PADC, C1), rows >= C_H are 0
    b1p = pk_ref[:, 10:11]                         # (PADC, 1),  rows >= C_H are 0
    bl1 = pk_ref[0:C_H, 11:12]
    al1 = pk_ref[0:C_H, 12:13]
    b2 = pk_ref[0:C2, 13:14]
    bl2 = pk_ref[0:C2, 14:15]
    al2 = pk_ref[0:C2, 15:16]

    def silu(v):
        # exact sigmoid via one EUP tanh: sigmoid(v) = 0.5*(tanh(v/2)+1)
        return 0.5 * v * (jnp.tanh(0.5 * v) + 1.0)

    def prelu(v, a):
        return jnp.where(v > 0, v, a * v)

    # ---- cv1: 1x1 conv (BN folded into weight) + SiLU ----------------------
    y1 = silu(jnp.dot(w1p, x, preferred_element_type=jnp.float32) + b1p)  # (PADC, LANES)

    # ---- cv2: 3x3 conv pad=1 as ONE bf16 im2col matmul ---------------------
    # tap (dy,dx): out(m,n) reads y1(m+dy-1, n+dx-1) -> lane roll by -(dy-1)*N-(dx-1)
    # (roll wrap-around / batch-seam leakage is zeroed by the boundary masks)
    taps = []
    for dy in range(3):
        for dx in range(3):
            s = (dy - 1) * N + (dx - 1)
            taps.append(y1 if s == 0 else pltpu.roll(y1, shift=(-s) % LANES, axis=1))
    patch = (jnp.concatenate(taps, axis=0) * msk_ref[...]).astype(jnp.bfloat16)
    x1 = silu(jnp.dot(w2_ref[...], patch,
                      preferred_element_type=jnp.float32) + b2)           # (C2, LANES)

    # ---- LSE attention branch ----------------------------------------------
    pooled = jnp.dot(x, poolT_ref[...], preferred_element_type=jnp.float32)  # (C1, BLL)
    # tiny 1x1 convs as unrolled VPU broadcast-FMA (no MXU round-trip on the
    # serial pooled -> y -> z -> softmax -> upsample chain)
    acc1 = pk_ref[0:C_H, 4:5] * pooled[0:1, :]
    for k in range(1, C1):
        acc1 = acc1 + pk_ref[0:C_H, 4 + k:5 + k] * pooled[k:k + 1, :]
    y = prelu(acc1 + bl1, al1)                                            # (C_H, BLL)
    acc2 = pk_ref[0:C2, 8:9] * y[0:1, :]
    for k in range(1, C_H):
        acc2 = acc2 + pk_ref[0:C2, 8 + k:9 + k] * y[k:k + 1, :]
    z = prelu(acc2 + bl2, al2)                                            # (C2, BLL)
    # softmax over channels (sublane axis)
    ez = jnp.exp(z - jnp.max(z, axis=0, keepdims=True))
    att = ez * pl.reciprocal(jnp.sum(ez, axis=0, keepdims=True), approx=True)
    att_full = jnp.dot(att, upsT_ref[...],
                       preferred_element_type=jnp.float32)                # (C2, LANES)

    out = x1 * att_full
    if add:
        out = out + x
    for b in range(nb):                               # two lane-dense 256-wide stores
        o_ref[b] = out[:, b * MN:(b + 1) * MN]


# ----------------------------------------------------------------------------
# Wrapper
# ----------------------------------------------------------------------------
def lse_bottleneck(x_nchw, p):
    nb = x_nchw.shape[0]
    assert nb == B, "constant operands are built for batch size B"
    x = x_nchw.reshape(nb, C1, MN).astype(jnp.float32)   # NCHW -> (B, C, M*N), free

    # Single grid step (batch folded onto lanes). On v7x this is consciously
    # single-TC: per-core launch overhead outweighs splitting 2 tiny elements.
    out = pl.pallas_call(
        functools.partial(_fused_kernel, nb=nb, add=ADD),
        out_shape=jax.ShapeDtypeStruct((nb, C2, MN), jnp.float32),
        grid=(1,),
        in_specs=[
            pl.BlockSpec((nb, C1, MN), lambda i: (0, 0, 0)),
            pl.BlockSpec((PADC, 16), lambda i: (0, 0)),
            pl.BlockSpec((C2, 9 * PADC), lambda i: (0, 0)),
            pl.BlockSpec((9 * PADC, LANES), lambda i: (0, 0)),
            pl.BlockSpec((LANES, BLL), lambda i: (0, 0)),
            pl.BlockSpec((BLL, LANES), lambda i: (0, 0)),
        ],
        out_specs=pl.BlockSpec((nb, C2, MN), lambda i: (0, 0, 0)),
        compiler_params=pltpu.CompilerParams(dimension_semantics=("arbitrary",)),
    )(x, p['pk'], p['w2f'], p['masks'], p['poolT'], p['upsT'])

    return out.reshape(nb, C2, M, N)                      # -> NCHW, free


# ----------------------------------------------------------------------------
# Deterministic parameters / pooling matrices
# ----------------------------------------------------------------------------
def adaptive_pool_matrix(out_size, in_size):
    """Row-stochastic matrix implementing PyTorch 1-D adaptive average pooling."""
    mat = np.zeros((out_size, in_size), np.float32)
    for i in range(out_size):
        s = (i * in_size) // out_size
        e = -((-(i + 1) * in_size) // out_size)   # ceil
        mat[i, s:e] = 1.0 / float(e - s)
    return mat


def fold_bn(gamma, beta, mean, var, eps=BN_EPS):
    scale = gamma / np.sqrt(var + eps)
    return scale.astype(np.float32), (beta - mean * scale).astype(np.float32)


def make_params():
    rng = np.random.default_rng(0)

    def bn(c):
        gamma = (1.0 + 0.1 * rng.standard_normal(c)).astype(np.float32)
        beta = (0.1 * rng.standard_normal(c)).astype(np.float32)
        mean = (0.1 * rng.standard_normal(c)).astype(np.float32)
        var = (1.0 + 0.1 * np.abs(rng.standard_normal(c))).astype(np.float32)
        return fold_bn(gamma, beta, mean, var)

    # cv1 = Conv2d(C1, C_H, 1, bias=False) + BN + SiLU
    w1 = (0.4 * rng.standard_normal((C1, C_H))).astype(np.float32)
    s1, b1 = bn(C_H)
    # cv2 = Conv2d(C_H, C2, 3, pad=1, bias=False) + BN + SiLU   (w2[t] = (cin, cout))
    w2 = (0.3 * rng.standard_normal((9, C_H, C2))).astype(np.float32)
    s2, b2 = bn(C2)
    # LSE branch: Conv1x1 + BN + PReLU, Conv1x1 + BN + PReLU
    wl1 = (0.4 * rng.standard_normal((C1, C_H))).astype(np.float32)
    sl1, bl1 = bn(C_H)
    al1 = np.full((C_H,), 0.25, np.float32)
    wl2 = (0.4 * rng.standard_normal((C_H, C2))).astype(np.float32)
    sl2, bl2 = bn(C2)
    al2 = np.full((C2,), 0.25, np.float32)

    # adaptive pool (M,N)->(L,L) and upsample (L,L)->(M,N) as Kronecker matrices
    ph = adaptive_pool_matrix(L, M)
    pw = adaptive_pool_matrix(L, N)
    uh = adaptive_pool_matrix(M, L)
    uw = adaptive_pool_matrix(N, L)
    pool = np.kron(ph, pw)                        # (LL, MN)
    ups = np.kron(uh, uw)                         # (MN, LL)

    # ---- kernel-side packed / BN-folded params -----------------------------
    pk = np.zeros((PADC, 16), np.float32)
    pk[0:C_H, 0:C1] = s1[:, None] * w1.T          # cv1 weight  (C_H, C1), scaled
    pk[0:C_H, 4:4 + C1] = sl1[:, None] * wl1.T    # lse conv1   (C_H, C1), scaled
    pk[0:C2, 8:8 + C_H] = sl2[:, None] * wl2.T    # lse conv2   (C2, C_H), scaled
    pk[0:C_H, 10] = b1
    pk[0:C_H, 11] = bl1
    pk[0:C_H, 12] = al1
    pk[0:C2, 13] = b2
    pk[0:C2, 14] = bl2
    pk[0:C2, 15] = al2

    # dense im2col weight (C2, 9*PADC); columns for padded channel rows stay 0
    w2f = np.zeros((C2, 9 * PADC), np.float32)
    for t in range(9):
        w2f[:, t * PADC:t * PADC + C_H] = s2[:, None] * w2[t].T

    # per-tap zero-padding boundary masks over flattened (m*N + n) spatial index,
    # pre-broadcast to the full im2col row layout and tiled across batch lanes
    masks = np.zeros((9, MN), np.float32)
    mm, nn = np.meshgrid(np.arange(M), np.arange(N), indexing='ij')
    mm = mm.reshape(-1)
    nn = nn.reshape(-1)
    for dy in range(3):
        for dx in range(3):
            ok = ((mm + dy - 1 >= 0) & (mm + dy - 1 < M) &
                  (nn + dx - 1 >= 0) & (nn + dx - 1 < N))
            masks[dy * 3 + dx] = ok.astype(np.float32)
    masks_full = np.tile(np.repeat(masks, PADC, axis=0), (1, B))   # (9*PADC, B*MN)

    # block-diagonal (per batch) pool / upsample matrices, transposed for x @ P
    poolT = np.zeros((B * MN, B * LL), np.float32)
    upsT = np.zeros((B * LL, B * MN), np.float32)
    for bb in range(B):
        poolT[bb * MN:(bb + 1) * MN, bb * LL:(bb + 1) * LL] = pool.T
        upsT[bb * LL:(bb + 1) * LL, bb * MN:(bb + 1) * MN] = ups.T

    return dict(
        # raw / folded params for the pure-JAX reference
        w1=jnp.asarray(w1), s1=jnp.asarray(s1), b1=jnp.asarray(b1),
        w2=jnp.asarray(w2), s2=jnp.asarray(s2), b2=jnp.asarray(b2),
        wl1=jnp.asarray(wl1), sl1=jnp.asarray(sl1), bl1=jnp.asarray(bl1),
        al1=jnp.asarray(al1),
        wl2=jnp.asarray(wl2), sl2=jnp.asarray(sl2), bl2=jnp.asarray(bl2),
        al2=jnp.asarray(al2),
        ph=jnp.asarray(ph), pw=jnp.asarray(pw),
        uh=jnp.asarray(uh), uw=jnp.asarray(uw),
        # kernel-side operands
        pk=jnp.asarray(pk),
        w2f=jnp.asarray(w2f, dtype=jnp.bfloat16),   # bf16 MXU operand
        masks=jnp.asarray(masks_full),
        poolT=jnp.asarray(poolT),
        upsT=jnp.asarray(upsT),
    )


# ----------------------------------------------------------------------------
# Pure-JAX reference (independent code path) for correctness check
# ----------------------------------------------------------------------------
def reference(x_nchw, p):
    x = jnp.transpose(x_nchw, (0, 2, 3, 1)).astype(jnp.float32)   # NHWC
    silu = lambda v: v * jax.nn.sigmoid(v)
    prelu = lambda v, a: jnp.where(v > 0, v, a * v)
    # cv1
    y1 = silu(jnp.einsum('bmnc,cd->bmnd', x, p['w1']) * p['s1'] + p['b1'])
    # cv2
    y1p = jnp.pad(y1, ((0, 0), (1, 1), (1, 1), (0, 0)))
    acc = jnp.zeros((x.shape[0], M, N, C2), jnp.float32)
    for dy in range(3):
        for dx in range(3):
            acc = acc + jnp.einsum('bmnc,cd->bmnd',
                                   y1p[:, dy:dy + M, dx:dx + N, :],
                                   p['w2'][dy * 3 + dx])
    x1 = silu(acc * p['s2'] + p['b2'])
    # LSE branch
    pooled = jnp.einsum('lm,bmnc,kn->blkc', p['ph'], x, p['pw'])
    y = prelu(jnp.einsum('blkc,cd->blkd', pooled, p['wl1']) * p['sl1'] + p['bl1'],
              p['al1'])
    z = prelu(jnp.einsum('blkd,de->blke', y, p['wl2']) * p['sl2'] + p['bl2'],
              p['al2'])
    att = jax.nn.softmax(z, axis=-1)
    att_full = jnp.einsum('ml,blke,nk->bmne', p['uh'], att, p['uw'])
    out = x1 * att_full
    if ADD:
        out = out + x
    return jnp.transpose(out, (0, 3, 1, 2))


if __name__ == "__main__":
    params = make_params()
    x = jax.random.uniform(jax.random.PRNGKey(0), (B, C1, M, N), dtype=jnp.float32)

    fwd = jax.jit(lambda v: lse_bottleneck(v, params))
    out = jax.block_until_ready(fwd(x))
    ref = jax.block_until_ready(reference(x, params))

    assert out.shape == (B, C2, M, N)
    # Tolerance accounts for bf16 MXU operands on the 3x3 conv and the
    # approximate reciprocal in the softmax denominator (SiLU is exact now).
    np.testing.assert_allclose(np.asarray(out), np.asarray(ref),
                               rtol=2e-2, atol=5e-3)
    print("KERNEL_OK")
</pallas_src>

<mosaic_0001>
module attributes {stable_mosaic.version = 11 : i64} {
  func.func @_fused_kernel(%arg0: i32, %arg1: memref<2x4x256xf32, #tpu.memory_space<vmem>>, %arg2: memref<8x16xf32, #tpu.memory_space<vmem>>, %arg3: memref<4x72xbf16, #tpu.memory_space<vmem>>, %arg4: memref<72x512xf32, #tpu.memory_space<vmem>>, %arg5: memref<512x50xf32, #tpu.memory_space<vmem>>, %arg6: memref<50x512xf32, #tpu.memory_space<vmem>>, %arg7: memref<2x4x256xf32, #tpu.memory_space<vmem>>) attributes {dimension_semantics = [#tpu.dimension_semantics<arbitrary>], iteration_bounds = array<i64: 1>, scalar_prefetch = 0 : i64, scratch_operands = 0 : i64, tpu.core_type = #tpu.core_type<tc>, window_params = [{pipeline_mode = #tpu.pipeline_mode<synchronous>, transform_indices = @transform_0, window_bounds = array<i64: 2, 4, 256>}, {pipeline_mode = #tpu.pipeline_mode<synchronous>, transform_indices = @transform_1, window_bounds = array<i64: 8, 16>}, {pipeline_mode = #tpu.pipeline_mode<synchronous>, transform_indices = @transform_2, window_bounds = array<i64: 4, 72>}, {pipeline_mode = #tpu.pipeline_mode<synchronous>, transform_indices = @transform_3, window_bounds = array<i64: 72, 512>}, {pipeline_mode = #tpu.pipeline_mode<synchronous>, transform_indices = @transform_4, window_bounds = array<i64: 512, 50>}, {pipeline_mode = #tpu.pipeline_mode<synchronous>, transform_indices = @transform_5, window_bounds = array<i64: 50, 512>}, {pipeline_mode = #tpu.pipeline_mode<synchronous>, transform_indices = @transform_6, window_bounds = array<i64: 2, 4, 256>}]} {
    %c0 = arith.constant 0 : index
    %c0_0 = arith.constant 0 : index
    %c0_1 = arith.constant 0 : index
    %0 = vector.load %arg1[%c0, %c0_0, %c0_1] : memref<2x4x256xf32, #tpu.memory_space<vmem>>, vector<1x4x256xf32>
    %1 = vector.shape_cast %0 : vector<1x4x256xf32> to vector<4x256xf32>
    %c1 = arith.constant 1 : index
    %c0_2 = arith.constant 0 : index
    %c0_3 = arith.constant 0 : index
    %2 = vector.load %arg1[%c1, %c0_2, %c0_3] : memref<2x4x256xf32, #tpu.memory_space<vmem>>, vector<1x4x256xf32>
    %3 = vector.shape_cast %2 : vector<1x4x256xf32> to vector<4x256xf32>
    %4 = tpu.concatenate %1, %3 in 1 : vector<4x256xf32>, vector<4x256xf32> -> vector<4x512xf32>
    %c0_4 = arith.constant 0 : index
    %c0_5 = arith.constant 0 : index
    %5 = vector.load %arg2[%c0_4, %c0_5] : memref<8x16xf32, #tpu.memory_space<vmem>>, vector<8x4xf32>
    %c0_6 = arith.constant 0 : index
    %c10 = arith.constant 10 : index
    %6 = vector.load %arg2[%c0_6, %c10] : memref<8x16xf32, #tpu.memory_space<vmem>>, vector<8x1xf32>
    %c0_7 = arith.constant 0 : index
    %c11 = arith.constant 11 : index
    %7 = vector.load %arg2[%c0_7, %c11] : memref<8x16xf32, #tpu.memory_space<vmem>>, vector<2x1xf32>
    %c0_8 = arith.constant 0 : index
    %c12 = arith.constant 12 : index
    %8 = vector.load %arg2[%c0_8, %c12] : memref<8x16xf32, #tpu.memory_space<vmem>>, vector<2x1xf32>
    %c0_9 = arith.constant 0 : index
    %c13 = arith.constant 13 : index
    %9 = vector.load %arg2[%c0_9, %c13] : memref<8x16xf32, #tpu.memory_space<vmem>>, vector<4x1xf32>
    %c0_10 = arith.constant 0 : index
    %c14 = arith.constant 14 : index
    %10 = vector.load %arg2[%c0_10, %c14] : memref<8x16xf32, #tpu.memory_space<vmem>>, vector<4x1xf32>
    %c0_11 = arith.constant 0 : index
    %c15 = arith.constant 15 : index
    %11 = vector.load %arg2[%c0_11, %c15] : memref<8x16xf32, #tpu.memory_space<vmem>>, vector<4x1xf32>
    %cst = arith.constant dense<0.000000e+00> : vector<8x512xf32>
    %12 = tpu.matmul %5, %4, %cst {dimension_numbers = #tpu.dot_dimension_numbers<[1], [0], [0], [1], [0, 0, 1, 1], [], []>} : vector<8x4xf32>, vector<4x512xf32>, vector<8x512xf32> -> vector<8x512xf32>
    %13 = vector.broadcast %6 : vector<8x1xf32> to vector<8x512xf32>
    %14 = arith.addf %12, %13 : vector<8x512xf32>
    %cst_12 = arith.constant 5.000000e-01 : f32
    %15 = vector.broadcast %cst_12 : f32 to vector<8x512xf32>
    %16 = arith.mulf %15, %14 : vector<8x512xf32>
    %cst_13 = arith.constant 5.000000e-01 : f32
    %17 = vector.broadcast %cst_13 : f32 to vector<8x512xf32>
    %18 = arith.mulf %17, %14 : vector<8x512xf32>
    %19 = math.tanh %18 : vector<8x512xf32>
    %cst_14 = arith.constant 1.000000e+00 : f32
    %20 = vector.broadcast %cst_14 : f32 to vector<8x512xf32>
    %21 = arith.addf %19, %20 : vector<8x512xf32>
    %22 = arith.mulf %16, %21 : vector<8x512xf32>
    %c17_i32 = arith.constant 17 : i32
    %23 = tpu.dynamic_rotate %22 by %c17_i32 dim 1 : vector<8x512xf32>, i32 -> vector<8x512xf32>
    %c16_i32 = arith.constant 16 : i32
    %24 = tpu.dynamic_rotate %22 by %c16_i32 dim 1 : vector<8x512xf32>, i32 -> vector<8x512xf32>
    %c15_i32 = arith.constant 15 : i32
    %25 = tpu.dynamic_rotate %22 by %c15_i32 dim 1 : vector<8x512xf32>, i32 -> vector<8x512xf32>
    %c1_i32 = arith.constant 1 : i32
    %26 = tpu.dynamic_rotate %22 by %c1_i32 dim 1 : vector<8x512xf32>, i32 -> vector<8x512xf32>
    %c511_i32 = arith.constant 511 : i32
    %27 = tpu.dynamic_rotate %22 by %c511_i32 dim 1 : vector<8x512xf32>, i32 -> vector<8x512xf32>
    %c497_i32 = arith.constant 497 : i32
    %28 = tpu.dynamic_rotate %22 by %c497_i32 dim 1 : vector<8x512xf32>, i32 -> vector<8x512xf32>
    %c496_i32 = arith.constant 496 : i32
    %29 = tpu.dynamic_rotate %22 by %c496_i32 dim 1 : vector<8x512xf32>, i32 -> vector<8x512xf32>
    %c495_i32 = arith.constant 495 : i32
    %30 = tpu.dynamic_rotate %22 by %c495_i32 dim 1 : vector<8x512xf32>, i32 -> vector<8x512xf32>
    %31 = tpu.concatenate %23, %24, %25, %26, %22, %27, %28, %29, %30 in 0 : vector<8x512xf32>, vector<8x512xf32>, vector<8x512xf32>, vector<8x512xf32>, vector<8x512xf32>, vector<8x512xf32>, vector<8x512xf32>, vector<8x512xf32>, vector<8x512xf32> -> vector<72x512xf32>
    %c0_15 = arith.constant 0 : index
    %c0_16 = arith.constant 0 : index
    %32 = vector.load %arg4[%c0_15, %c0_16] : memref<72x512xf32, #tpu.memory_space<vmem>>, vector<72x512xf32>
    %33 = arith.mulf %31, %32 : vector<72x512xf32>
    %34 = arith.truncf %33 : vector<72x512xf32> to vector<72x512xbf16>
    %c0_17 = arith.constant 0 : index
    %c0_18 = arith.constant 0 : index
    %35 = vector.load %arg3[%c0_17, %c0_18] : memref<4x72xbf16, #tpu.memory_space<vmem>>, vector<4x72xbf16>
    %cst_19 = arith.constant dense<0.000000e+00> : vector<4x512xf32>
    %36 = tpu.matmul %35, %34, %cst_19 {dimension_numbers = #tpu.dot_dimension_numbers<[1], [0], [0], [1], [0, 0, 1, 1], [], []>} : vector<4x72xbf16>, vector<72x512xbf16>, vector<4x512xf32> -> vector<4x512xf32>
    %37 = vector.broadcast %9 : vector<4x1xf32> to vector<4x512xf32>
    %38 = arith.addf %36, %37 : vector<4x512xf32>
    %cst_20 = arith.constant 5.000000e-01 : f32
    %39 = vector.broadcast %cst_20 : f32 to vector<4x512xf32>
    %40 = arith.mulf %39, %38 : vector<4x512xf32>
    %cst_21 = arith.constant 5.000000e-01 : f32
    %41 = vector.broadcast %cst_21 : f32 to vector<4x512xf32>
    %42 = arith.mulf %41, %38 : vector<4x512xf32>
    %43 = math.tanh %42 : vector<4x512xf32>
    %cst_22 = arith.constant 1.000000e+00 : f32
    %44 = vector.broadcast %cst_22 : f32 to vector<4x512xf32>
    %45 = arith.addf %43, %44 : vector<4x512xf32>
    %46 = arith.mulf %40, %45 : vector<4x512xf32>
    %c0_23 = arith.constant 0 : index
    %c0_24 = arith.constant 0 : index
    %47 = vector.load %arg5[%c0_23, %c0_24] : memref<512x50xf32, #tpu.memory_space<vmem>>, vector<512x50xf32>
    %cst_25 = arith.constant dense<0.000000e+00> : vector<4x50xf32>
    %48 = tpu.matmul %4, %47, %cst_25 {dimension_numbers = #tpu.dot_dimension_numbers<[1], [0], [0], [1], [0, 0, 1, 1], [], []>} : vector<4x512xf32>, vector<512x50xf32>, vector<4x50xf32> -> vector<4x50xf32>
    %c0_26 = arith.constant 0 : index
    %c4 = arith.constant 4 : index
    %49 = vector.load %arg2[%c0_26, %c4] : memref<8x16xf32, #tpu.memory_space<vmem>>, vector<2x1xf32>
    %50 = vector.extract_strided_slice %48 {offsets = [0, 0], sizes = [1, 50], strides = [1, 1]} : vector<4x50xf32> to vector<1x50xf32>
    %51 = vector.broadcast %49 : vector<2x1xf32> to vector<2x50xf32>
    %52 = vector.broadcast %50 : vector<1x50xf32> to vector<2x50xf32>
    %53 = arith.mulf %51, %52 : vector<2x50xf32>
    %c0_27 = arith.constant 0 : index
    %c5 = arith.constant 5 : index
    %54 = vector.load %arg2[%c0_27, %c5] : memref<8x16xf32, #tpu.memory_space<vmem>>, vector<2x1xf32>
    %55 = vector.extract_strided_slice %48 {offsets = [1, 0], sizes = [1, 50], strides = [1, 1]} : vector<4x50xf32> to vector<1x50xf32>
    %56 = vector.broadcast %54 : vector<2x1xf32> to vector<2x50xf32>
    %57 = vector.broadcast %55 : vector<1x50xf32> to vector<2x50xf32>
    %58 = arith.mulf %56, %57 : vector<2x50xf32>
    %59 = arith.addf %53, %58 : vector<2x50xf32>
    %c0_28 = arith.constant 0 : index
    %c6 = arith.constant 6 : index
    %60 = vector.load %arg2[%c0_28, %c6] : memref<8x16xf32, #tpu.memory_space<vmem>>, vector<2x1xf32>
    %61 = vector.extract_strided_slice %48 {offsets = [2, 0], sizes = [1, 50], strides = [1, 1]} : vector<4x50xf32> to vector<1x50xf32>
    %62 = vector.broadcast %60 : vector<2x1xf32> to vector<2x50xf32>
    %63 = vector.broadcast %61 : vector<1x50xf32> to vector<2x50xf32>
    %64 = arith.mulf %62, %63 : vector<2x50xf32>
    %65 = arith.addf %59, %64 : vector<2x50xf32>
    %c0_29 = arith.constant 0 : index
    %c7 = arith.constant 7 : index
    %66 = vector.load %arg2[%c0_29, %c7] : memref<8x16xf32, #tpu.memory_space<vmem>>, vector<2x1xf32>
    %67 = vector.extract_strided_slice %48 {offsets = [3, 0], sizes = [1, 50], strides = [1, 1]} : vector<4x50xf32> to vector<1x50xf32>
    %68 = vector.broadcast %66 : vector<2x1xf32> to vector<2x50xf32>
    %69 = vector.broadcast %67 : vector<1x50xf32> to vector<2x50xf32>
    %70 = arith.mulf %68, %69 : vector<2x50xf32>
    %71 = arith.addf %65, %70 : vector<2x50xf32>
    %72 = vector.broadcast %7 : vector<2x1xf32> to vector<2x50xf32>
    %73 = arith.addf %71, %72 : vector<2x50xf32>
    %cst_30 = arith.constant 0.000000e+00 : f32
    %74 = vector.broadcast %cst_30 : f32 to vector<2x50xf32>
    %75 = arith.cmpf ogt, %73, %74 : vector<2x50xf32>
    %76 = vector.broadcast %8 : vector<2x1xf32> to vector<2x50xf32>
    %77 = arith.mulf %76, %73 : vector<2x50xf32>
    %78 = arith.select %75, %73, %77 : vector<2x50xi1>, vector<2x50xf32>
    %c0_31 = arith.constant 0 : index
    %c8 = arith.constant 8 : index
    %79 = vector.load %arg2[%c0_31, %c8] : memref<8x16xf32, #tpu.memory_space<vmem>>, vector<4x1xf32>
    %80 = vector.extract_strided_slice %78 {offsets = [0, 0], sizes = [1, 50], strides = [1, 1]} : vector<2x50xf32> to vector<1x50xf32>
    %81 = vector.broadcast %79 : vector<4x1xf32> to vector<4x50xf32>
    %82 = vector.broadcast %80 : vector<1x50xf32> to vector<4x50xf32>
    %83 = arith.mulf %81, %82 : vector<4x50xf32>
    %c0_32 = arith.constant 0 : index
    %c9 = arith.constant 9 : index
    %84 = vector.load %arg2[%c0_32, %c9] : memref<8x16xf32, #tpu.memory_space<vmem>>, vector<4x1xf32>
    %85 = vector.extract_strided_slice %78 {offsets = [1, 0], sizes = [1, 50], strides = [1, 1]} : vector<2x50xf32> to vector<1x50xf32>
    %86 = vector.broadcast %84 : vector<4x1xf32> to vector<4x50xf32>
    %87 = vector.broadcast %85 : vector<1x50xf32> to vector<4x50xf32>
    %88 = arith.mulf %86, %87 : vector<4x50xf32>
    %89 = arith.addf %83, %88 : vector<4x50xf32>
    %90 = vector.broadcast %10 : vector<4x1xf32> to vector<4x50xf32>
    %91 = arith.addf %89, %90 : vector<4x50xf32>
    %cst_33 = arith.constant 0.000000e+00 : f32
    %92 = vector.broadcast %cst_33 : f32 to vector<4x50xf32>
    %93 = arith.cmpf ogt, %91, %92 : vector<4x50xf32>
    %94 = vector.broadcast %11 : vector<4x1xf32> to vector<4x50xf32>
    %95 = arith.mulf %94, %91 : vector<4x50xf32>
    %96 = arith.select %93, %91, %95 : vector<4x50xi1>, vector<4x50xf32>
    %cst_34 = arith.constant dense<0xFF800000> : vector<50xf32>
    %97 = vector.multi_reduction <maximumf>, %96, %cst_34 [0] : vector<4x50xf32> to vector<50xf32>
    %98 = vector.shape_cast %97 : vector<50xf32> to vector<1x50xf32>
    %99 = vector.broadcast %98 : vector<1x50xf32> to vector<4x50xf32>
    %100 = arith.subf %96, %99 : vector<4x50xf32>
    %101 = math.exp %100 : vector<4x50xf32>
    %cst_35 = arith.constant dense<0.000000e+00> : vector<50xf32>
    %102 = vector.multi_reduction <add>, %101, %cst_35 [0] : vector<4x50xf32> to vector<50xf32>
    %103 = vector.shape_cast %102 : vector<50xf32> to vector<1x50xf32>
    %104 = tpu.reciprocal %103 {approx = true} : vector<1x50xf32> -> vector<1x50xf32>
    %105 = vector.broadcast %104 : vector<1x50xf32> to vector<4x50xf32>
    %106 = arith.mulf %101, %105 : vector<4x50xf32>
    %c0_36 = arith.constant 0 : index
    %c0_37 = arith.constant 0 : index
    %107 = vector.load %arg6[%c0_36, %c0_37] : memref<50x512xf32, #tpu.memory_space<vmem>>, vector<50x512xf32>
    %cst_38 = arith.constant dense<0.000000e+00> : vector<4x512xf32>
    %108 = tpu.matmul %106, %107, %cst_38 {dimension_numbers = #tpu.dot_dimension_numbers<[1], [0], [0], [1], [0, 0, 1, 1], [], []>} : vector<4x50xf32>, vector<50x512xf32>, vector<4x512xf32> -> vector<4x512xf32>
    %109 = arith.mulf %46, %108 : vector<4x512xf32>
    %110 = arith.addf %109, %4 : vector<4x512xf32>
    %111 = vector.extract_strided_slice %110 {offsets = [0, 0], sizes = [4, 256], strides = [1, 1]} : vector<4x512xf32> to vector<4x256xf32>
    %c0_39 = arith.constant 0 : index
    %c0_40 = arith.constant 0 : index
    %c0_41 = arith.constant 0 : index
    %112 = vector.load %arg7[%c0_39, %c0_40, %c0_41] : memref<2x4x256xf32, #tpu.memory_space<vmem>>, vector<1x4x256xf32>
    %113 = vector.shape_cast %112 : vector<1x4x256xf32> to vector<4x256xf32>
    %114 = vector.shape_cast %111 : vector<4x256xf32> to vector<1x4x256xf32>
    tpu.vector_store %arg7[%c0_39, %c0_40, %c0_41], %114 {strides = array<i32>} : memref<2x4x256xf32, #tpu.memory_space<vmem>>, vector<1x4x256xf32>,
    %115 = vector.extract_strided_slice %110 {offsets = [0, 256], sizes = [4, 256], strides = [1, 1]} : vector<4x512xf32> to vector<4x256xf32>
    %c1_42 = arith.constant 1 : index
    %c0_43 = arith.constant 0 : index
    %c0_44 = arith.constant 0 : index
    %116 = vector.load %arg7[%c1_42, %c0_43, %c0_44] : memref<2x4x256xf32, #tpu.memory_space<vmem>>, vector<1x4x256xf32>
    %117 = vector.shape_cast %116 : vector<1x4x256xf32> to vector<4x256xf32>
    %118 = vector.shape_cast %115 : vector<4x256xf32> to vector<1x4x256xf32>
    tpu.vector_store %arg7[%c1_42, %c0_43, %c0_44], %118 {strides = array<i32>} : memref<2x4x256xf32, #tpu.memory_space<vmem>>, vector<1x4x256xf32>,
    return
  }
  func.func @transform_0(%arg0: i32) -> (i32, i32, i32) {
    %c0_i32 = arith.constant 0 : i32
    %c0_i32_0 = arith.constant 0 : i32
    %c0_i32_1 = arith.constant 0 : i32
    %c0_i32_2 = arith.constant 0 : i32
    return %c0_i32, %c0_i32_0, %c0_i32_1 : i32, i32, i32
  }
  func.func @transform_1(%arg0: i32) -> (i32, i32) {
    %c0_i32 = arith.constant 0 : i32
    %c0_i32_0 = arith.constant 0 : i32
    %c0_i32_1 = arith.constant 0 : i32
    return %c0_i32, %c0_i32_0 : i32, i32
  }
  func.func @transform_2(%arg0: i32) -> (i32, i32) {
    %c0_i32 = arith.constant 0 : i32
    %c0_i32_0 = arith.constant 0 : i32
    %c0_i32_1 = arith.constant 0 : i32
    return %c0_i32, %c0_i32_0 : i32, i32
  }
  func.func @transform_3(%arg0: i32) -> (i32, i32) {
    %c0_i32 = arith.constant 0 : i32
    %c0_i32_0 = arith.constant 0 : i32
    %c0_i32_1 = arith.constant 0 : i32
    return %c0_i32, %c0_i32_0 : i32, i32
  }
  func.func @transform_4(%arg0: i32) -> (i32, i32) {
    %c0_i32 = arith.constant 0 : i32
    %c0_i32_0 = arith.constant 0 : i32
    %c0_i32_1 = arith.constant 0 : i32
    return %c0_i32, %c0_i32_0 : i32, i32
  }
  func.func @transform_5(%arg0: i32) -> (i32, i32) {
    %c0_i32 = arith.constant 0 : i32
    %c0_i32_0 = arith.constant 0 : i32
    %c0_i32_1 = arith.constant 0 : i32
    return %c0_i32, %c0_i32_0 : i32, i32
  }
  func.func @transform_6(%arg0: i32) -> (i32, i32, i32) {
    %c0_i32 = arith.constant 0 : i32
    %c0_i32_0 = arith.constant 0 : i32
    %c0_i32_1 = arith.constant 0 : i32
    %c0_i32_2 = arith.constant 0 : i32
    return %c0_i32, %c0_i32_0, %c0_i32_1 : i32, i32, i32
  }
}

</mosaic_0001>

<llo_original>
// kernel: _lambda_.1
$region0: #{_lambda_.1}
  #allocation0 [shape = 'u32[]', space=smem, size = 0x4, offset = 0x4, fixed_abs, tag = 'smem constant byte address 0x4 - core index']
  #allocation1 [shape = 'u32[144,128]{1,0:T(1,128)}', space=vmem, size = 0x12000, scoped, tag = 'internal scratch']
  %s0 = inlined_call_operand.vmem [shape: f32[2,4,256], index: 0, kind: input, shape index: {}]
  %s1 = inlined_call_operand.vmem [shape: f32[8,16], index: 1, kind: input, shape index: {}]
  %s2 = inlined_call_operand.vmem [shape: bf16[4,72], index: 2, kind: input, shape index: {}]
  %s3 = inlined_call_operand.hbm [shape: f32[72,512], index: 3, kind: input, shape index: {}]
  %s4 = inlined_call_operand.hbm [shape: f32[512,50], index: 4, kind: input, shape index: {}]
  %s5 = inlined_call_operand.hbm [shape: f32[50,512], index: 5, kind: input, shape index: {}]
  %s6 = inlined_call_operand.vmem [shape: f32[2,4,256], index: 6, kind: output, shape index: {}]
  %s7 = sld [smem:[#allocation0]]
  $region46: #{_lambda_.1} parent=0
    _
  %s9 = ssub.s32 1, %s7
  %s10 = scalar_select 0, %s9, %s7
  $region1: #{_lambda_.1} parent=0
    #allocation2 [shape = 'u8[147456]{0}', space=vmem, size = 0x24000, scoped, tag = 'input window, operand 3, single buffered']
    #allocation3 [shape = 's32[1]{0}', space=sflag, size = 0x4, scoped, tag = 'scoped memory for _lambda_.1']
    #allocation4 [shape = 'u8[262144]{0}', space=vmem, size = 0x40000, scoped, tag = 'input window, operand 4, single buffered']
    #allocation5 [shape = 's32[1]{0}', space=sflag, size = 0x4, scoped, tag = 'scoped memory for _lambda_.1']
    #allocation6 [shape = 'u8[114688]{0}', space=vmem, size = 0x1c000, scoped, tag = 'input window, operand 5, single buffered']
    %11 = vsyncpa [#allocation3], 0
    %12 = vsyncpa [#allocation5], 0
    // Predicated region
    $region2: #{_lambda_.1} parent=1 // pred_check
      _
    $region3: #{_lambda_.1} parent=1 // pred_check_branch
      %14 = sbr.rel (0) target = $region5
    $region4: #{_lambda_.1} parent=1 // pred_region
      _
    $region5: #{_lambda_.1} parent=1 // pred_fallthru
      _
    // Predicated region
    $region6: #{_lambda_.1} parent=1 // pred_check
      _
    $region7: #{_lambda_.1} parent=1 // pred_check_branch
      %16 = sbr.rel (0) target = $region9
    $region8: #{_lambda_.1} parent=1 // pred_region
      _
    $region9: #{_lambda_.1} parent=1 // pred_fallthru
      _
    // Predicated region
    $region10: #{_lambda_.1} parent=1 // pred_check
      _
    $region11: #{_lambda_.1} parent=1 // pred_check_branch
      %18 = sbr.rel (0) target = $region13
    $region12: #{_lambda_.1} parent=1 // pred_region
      _
    $region13: #{_lambda_.1} parent=1 // pred_fallthru
      _
    // Predicated region
    $region14: #{_lambda_.1} parent=1 // pred_check
      _
    $region15: #{_lambda_.1} parent=1 // pred_check_branch
      %20 = sbr.rel (0) target = $region17
    $region16: #{_lambda_.1} parent=1 // pred_region
      %s22 = ssub.s32 4608, 4608
      %23 = vsyncadd [#allocation3], %s22
      %s24 = sshll.u32 [#allocation2], 4
      %s25 = int_to_ptr.vmem [resolvable:$true] %s24
      %30 = dma.hbm_to_vmem [thread:$0]  %s3, 4608, %s25, [#allocation3], 512, 512, 32
    $region17: #{_lambda_.1} parent=1 // pred_fallthru
      _
    // Predicated region
    $region18: #{_lambda_.1} parent=1 // pred_check
      _
    $region19: #{_lambda_.1} parent=1 // pred_check_branch
      %32 = sbr.rel (0) target = $region21
    $region20: #{_lambda_.1} parent=1 // pred_region
      %s34 = ssub.s32 8192, 8192
      %35 = vsyncadd [#allocation5], %s34
      %s36 = sshll.u32 [#allocation4], 4
      %s37 = int_to_ptr.vmem [resolvable:$true] %s36
      %42 = dma.hbm_to_vmem [thread:$0]  %s4, 8192, %s37, [#allocation5], 128, 128, 8
    $region21: #{_lambda_.1} parent=1 // pred_fallthru
      _
    // Predicated region
    $region22: #{_lambda_.1} parent=1 // pred_check
      _
    $region23: #{_lambda_.1} parent=1 // pred_check_branch
      %44 = sbr.rel (0) target = $region25
    $region24: #{_lambda_.1} parent=1 // pred_region
      %s46 = ssub.s32 3584, 3584
      %47 = vsyncadd [#allocation5], %s46
      %s48 = sshll.u32 [#allocation6], 4
      %s49 = int_to_ptr.vmem [resolvable:$true] %s48
      %54 = dma.hbm_to_vmem [thread:$0]  %s5, 3584, %s49, [#allocation5], 512, 512, 32
    $region25: #{_lambda_.1} parent=1 // pred_fallthru
      _
    // Predicated region
    $region26: #{_lambda_.1} parent=1 // pred_check
      _
    $region27: #{_lambda_.1} parent=1 // pred_check_branch
      %56 = sbr.rel (0) target = $region29
    $region28: #{_lambda_.1} parent=1 // pred_region
      %57 = dma.done [#allocation3], 4608
    $region29: #{_lambda_.1} parent=1 // pred_fallthru
      _
    // Predicated region
    $region30: #{_lambda_.1} parent=1 // pred_check
      _
    $region31: #{_lambda_.1} parent=1 // pred_check_branch
      %59 = sbr.rel (0) target = $region33
    $region32: #{_lambda_.1} parent=1 // pred_region
      %60 = dma.done [#allocation5], 8192
    $region33: #{_lambda_.1} parent=1 // pred_fallthru
      _
    // Predicated region
    $region34: #{_lambda_.1} parent=1 // pred_check
      _
    $region35: #{_lambda_.1} parent=1 // pred_check_branch
      %62 = sbr.rel (0) target = $region37
    $region36: #{_lambda_.1} parent=1 // pred_region
      %63 = dma.done [#allocation5], 3584
    $region37: #{_lambda_.1} parent=1 // pred_fallthru
      _
    %v65 = vld [vmem:[%s0] sm:$0xff]
    %s66 = scalar_lea.vmem %s0, 8
    %v67 = vld [vmem:[%s66] sm:$0xff]
    %v69 = vcombine.high %v65, %v65
    %v72 = vcombine.high %v67, %v67
    %v74 = vld [vmem:[%s1] sm:$0xff]
    %v75 = vld [vmem:[%s1] sm:$0x3]
    %v76 = vld [vmem:[%s1] sm:$0xf]
    %78 = vset.pattern.permute.xlu0 10
    %79 = vperm.xlu0 %78, %v74
    %v80 = vpop.permute.xlu0 %79
    %vm82 = vcmask 31744
    %v83 = vsel %vm82, %v74, 0
    %vm85 = vcmask 1043456
    %v86 = vsel %vm85, %v65, 0
    %v88 = vsel %vm85, %v69, 0
    %v90 = vsel %vm85, %v67, 0
    %v92 = vsel %vm85, %v72, 0
    %94 = vmatprep.subr.mxu0 %v88
    %95 = vmatpush1.msra.mxu0 %v86
    %96 = vmatprep.subr.mxu0 0.0
    %97 = vmatpush1.msra.mxu0 0.0
    %98 = vmatprep.subr.mxu0 0.0
    %99 = vmatpush1.msra.mxu0 0.0
    %100 = vmatprep.subr.mxu0 0.0
    %101 = vmatpush1.msra.mxu0 0.0
    %102 = vmatprep.subr.mxu0 0.0
    %103 = vmatpush1.msra.mxu0 0.0
    %104 = vmatprep.subr.mxu0 0.0
    %105 = vmatpush1.msra.mxu0 0.0
    %106 = vmatprep.subr.mxu0 0.0
    %107 = vmatpush1.msra.mxu0 0.0
    %108 = vmatprep.subr.mxu0 0.0
    %109 = vmatpush1.msra.mxu0 0.0
    %110 = vmatprep.subr.mxu0 0.0
    %111 = vmatpush1.msra.mxu0 0.0
    %112 = vmatprep.subr.mxu0 0.0
    %113 = vmatpush1.msra.mxu0 0.0
    %114 = vmatprep.subr.mxu0 0.0
    %115 = vmatpush1.msra.mxu0 0.0
    %116 = vmatprep.subr.mxu0 0.0
    %117 = vmatpush1.msra.mxu0 0.0
    %118 = vmatprep.subr.mxu0 0.0
    %119 = vmatpush1.msra.mxu0 0.0
    %120 = vmatprep.subr.mxu0 0.0
    %121 = vmatpush1.msra.mxu0 0.0
    %122 = vmatprep.subr.mxu0 0.0
    %123 = vmatpush1.msra.mxu0 0.0
    %124 = vmatprep.subr.mxu0 0.0
    %125 = vmatpush1.msra.mxu0 0.0
    %126 = vmatprep.subr.mxu0 0.0
    %127 = vmatpush1.msra.mxu0 0.0
    %128 = vmatprep.subr.mxu0 0.0
    %129 = vmatpush1.msra.mxu0 0.0
    %130 = vmatprep.subr.mxu0 0.0
    %131 = vmatpush1.msra.mxu0 0.0
    %132 = vmatprep.subr.mxu0 0.0
    %133 = vmatpush1.msra.mxu0 0.0
    %134 = vmatprep.subr.mxu0 0.0
    %135 = vmatpush1.msra.mxu0 0.0
    %136 = vmatprep.subr.mxu0 0.0
    %137 = vmatpush1.msra.mxu0 0.0
    %138 = vmatprep.subr.mxu0 0.0
    %139 = vmatpush1.msra.mxu0 0.0
    %140 = vmatprep.subr.mxu0 0.0
    %141 = vmatpush1.msra.mxu0 0.0
    %142 = vmatprep.subr.mxu0 0.0
    %143 = vmatpush1.msra.mxu0 0.0
    %144 = vmatprep.subr.mxu0 0.0
    %145 = vmatpush1.msra.mxu0 0.0
    %146 = vmatprep.subr.mxu0 0.0
    %147 = vmatpush1.msra.mxu0 0.0
    %148 = vmatprep.subr.mxu0 0.0
    %149 = vmatpush1.msra.mxu0 0.0
    %150 = vmatprep.subr.mxu0 0.0
    %151 = vmatpush1.msra.mxu0 0.0
    %152 = vmatprep.subr.mxu0 0.0
    %153 = vmatpush1.msra.mxu0 0.0
    %154 = vmatprep.subr.mxu0 0.0
    %155 = vmatpush1.msra.mxu0 0.0
    %156 = vmatprep.subr.mxu0 0.0
    %157 = vmatpush1.msra.mxu0 0.0
    %158 = vmatprep.mubr.f32.mxu0 0.0
    %159 = vmatmul.mubr.f32.gmra.mrb[0].mxu0 %v83
    %v160 = vpop.f32.mrb[0].mxu0
    %v161 = vadd.f32 %v80, %v160
    %v162 = vpop.f32.mrb[0].mxu0
    %v163 = vadd.f32 %v80, %v162
    %164 = vdwg.mxu0
    %165 = vmatprep.subr.mxu0 %v92
    %166 = vmatpush1.msra.mxu0 %v90
    %167 = vmatprep.subr.mxu0 0.0
    %168 = vmatpush1.msra.mxu0 0.0
    %169 = vmatprep.subr.mxu0 0.0
    %170 = vmatpush1.msra.mxu0 0.0
    %171 = vmatprep.subr.mxu0 0.0
    %172 = vmatpush1.msra.mxu0 0.0
    %173 = vmatprep.subr.mxu0 0.0
    %174 = vmatpush1.msra.mxu0 0.0
    %175 = vmatprep.subr.mxu0 0.0
    %176 = vmatpush1.msra.mxu0 0.0
    %177 = vmatprep.subr.mxu0 0.0
    %178 = vmatpush1.msra.mxu0 0.0
    %179 = vmatprep.subr.mxu0 0.0
    %180 = vmatpush1.msra.mxu0 0.0
    %181 = vmatprep.subr.mxu0 0.0
    %182 = vmatpush1.msra.mxu0 0.0
    %183 = vmatprep.subr.mxu0 0.0
    %184 = vmatpush1.msra.mxu0 0.0
    %185 = vmatprep.subr.mxu0 0.0
    %186 = vmatpush1.msra.mxu0 0.0
    %187 = vmatprep.subr.mxu0 0.0
    %188 = vmatpush1.msra.mxu0 0.0
    %189 = vmatprep.subr.mxu0 0.0
    %190 = vmatpush1.msra.mxu0 0.0
    %191 = vmatprep.subr.mxu0 0.0
    %192 = vmatpush1.msra.mxu0 0.0
    %193 = vmatprep.subr.mxu0 0.0
    %194 = vmatpush1.msra.mxu0 0.0
    %195 = vmatprep.subr.mxu0 0.0
    %196 = vmatpush1.msra.mxu0 0.0
    %197 = vmatprep.subr.mxu0 0.0
    %198 = vmatpush1.msra.mxu0 0.0
    %199 = vmatprep.subr.mxu0 0.0
    %200 = vmatpush1.msra.mxu0 0.0
    %201 = vmatprep.subr.mxu0 0.0
    %202 = vmatpush1.msra.mxu0 0.0
    %203 = vmatprep.subr.mxu0 0.0
    %204 = vmatpush1.msra.mxu0 0.0
    %205 = vmatprep.subr.mxu0 0.0
    %206 = vmatpush1.msra.mxu0 0.0
    %207 = vmatprep.subr.mxu0 0.0
    %208 = vmatpush1.msra.mxu0 0.0
    %209 = vmatprep.subr.mxu0 0.0
    %210 = vmatpush1.msra.mxu0 0.0
    %211 = vmatprep.subr.mxu0 0.0
    %212 = vmatpush1.msra.mxu0 0.0
    %213 = vmatprep.subr.mxu0 0.0
    %214 = vmatpush1.msra.mxu0 0.0
    %215 = vmatprep.subr.mxu0 0.0
    %216 = vmatpush1.msra.mxu0 0.0
    %217 = vmatprep.subr.mxu0 0.0
    %218 = vmatpush1.msra.mxu0 0.0
    %219 = vmatprep.subr.mxu0 0.0
    %220 = vmatpush1.msra.mxu0 0.0
    %221 = vmatprep.subr.mxu0 0.0
    %222 = vmatpush1.msra.mxu0 0.0
    %223 = vmatprep.subr.mxu0 0.0
    %224 = vmatpush1.msra.mxu0 0.0
    %225 = vmatprep.subr.mxu0 0.0
    %226 = vmatpush1.msra.mxu0 0.0
    %227 = vmatprep.subr.mxu0 0.0
    %228 = vmatpush1.msra.mxu0 0.0
    %229 = vmatprep.mubr.f32.mxu0 0.0
    %230 = vmatmul.mubr.f32.gmra.mrb[0].mxu0 %v83
    %v231 = vpop.f32.mrb[0].mxu0
    %v232 = vadd.f32 %v80, %v231
    %v233 = vpop.f32.mrb[0].mxu0
    %v234 = vadd.f32 %v80, %v233
    %235 = vdwg.mxu0
    %v236 = vmul.f32 %v161, 0.5
    %v237 = vmul.f32 %v163, 0.5
    %v238 = vmul.f32 %v232, 0.5
    %v239 = vmul.f32 %v234, 0.5
    %v240 = vtanh.pop %v236
    %v241 = vtanh.pop %v237
    %v242 = vtanh.pop %v238
    %v243 = vtanh.pop %v239
    %v244 = vadd.f32 %v240, 1.0
    %v245 = vadd.f32 %v241, 1.0
    %v246 = vadd.f32 %v242, 1.0
    %v247 = vadd.f32 %v243, 1.0
    %v248 = vmul.f32 %v236, %v244
    %v249 = vmul.f32 %v237, %v245
    %v250 = vmul.f32 %v238, %v246
    %v251 = vmul.f32 %v239, %v247
    %252 = vrot.lane.b32.xlu0 %v248, 17
    %v253 = vpop.permute.xlu0 %252
    %254 = vrot.lane.b32.xlu0 %v249, 17
    %v255 = vpop.permute.xlu0 %254
    %256 = vrot.lane.b32.xlu0 %v250, 17
    %v257 = vpop.permute.xlu0 %256
    %258 = vrot.lane.b32.xlu0 %v251, 17
    %v259 = vpop.permute.xlu0 %258
    %v260 = vlaneseq
    %v261 = vand.u32 %v260, 127
    %vm262 = vcmp.lt.s32.totalorder %v261, 17
    %v263 = vsel %vm262, %v257, %v259
    %v264 = vsel %vm262, %v255, %v257
    %v265 = vsel %vm262, %v253, %v255
    %v266 = vsel %vm262, %v259, %v253
    %267 = vrot.lane.b32.xlu0 %v248, 16
    %v268 = vpop.permute.xlu0 %267
    %269 = vrot.lane.b32.xlu0 %v249, 16
    %v270 = vpop.permute.xlu0 %269
    %271 = vrot.lane.b32.xlu0 %v250, 16
    %v272 = vpop.permute.xlu0 %271
    %273 = vrot.lane.b32.xlu0 %v251, 16
    %v274 = vpop.permute.xlu0 %273
    %vm275 = vcmp.lt.s32.totalorder %v261, 16
    %v276 = vsel %vm275, %v272, %v274
    %v277 = vsel %vm275, %v270, %v272
    %v278 = vsel %vm275, %v268, %v270
    %v279 = vsel %vm275, %v274, %v268
    %280 = vrot.lane.b32.xlu0 %v248, 15
    %v281 = vpop.permute.xlu0 %280
    %282 = vrot.lane.b32.xlu0 %v249, 15
    %v283 = vpop.permute.xlu0 %282
    %284 = vrot.lane.b32.xlu0 %v250, 15
    %v285 = vpop.permute.xlu0 %284
    %286 = vrot.lane.b32.xlu0 %v251, 15
    %v287 = vpop.permute.xlu0 %286
    %vm288 = vcmp.lt.s32.totalorder %v261, 15
    %v289 = vsel %vm288, %v285, %v287
    %v290 = vsel %vm288, %v283, %v285
    %v291 = vsel %vm288, %v281, %v283
    %v292 = vsel %vm288, %v287, %v281
    %293 = vrot.lane.b32.xlu0 %v248, 1
    %v294 = vpop.permute.xlu0 %293
    %295 = vrot.lane.b32.xlu0 %v249, 1
    %v296 = vpop.permute.xlu0 %295
    %297 = vrot.lane.b32.xlu0 %v250, 1
    %v298 = vpop.permute.xlu0 %297
    %299 = vrot.lane.b32.xlu0 %v251, 1
    %v300 = vpop.permute.xlu0 %299
    %vm301 = vcmp.lt.s32.totalorder %v261, 1
    %v302 = vsel %vm301, %v298, %v300
    %v303 = vsel %vm301, %v296, %v298
    %v304 = vsel %vm301, %v294, %v296
    %v305 = vsel %vm301, %v300, %v294
    %306 = vrot.lane.b32.xlu0 %v248, 127
    %v307 = vpop.permute.xlu0 %306
    %308 = vrot.lane.b32.xlu0 %v249, 127
    %v309 = vpop.permute.xlu0 %308
    %310 = vrot.lane.b32.xlu0 %v250, 127
    %v311 = vpop.permute.xlu0 %310
    %312 = vrot.lane.b32.xlu0 %v251, 127
    %v313 = vpop.permute.xlu0 %312
    %vm314 = vcmp.lt.s32.totalorder %v261, 127
    %v315 = vsel %vm314, %v311, %v313
    %v316 = vsel %vm314, %v309, %v311
    %v317 = vsel %vm314, %v307, %v309
    %v318 = vsel %vm314, %v313, %v307
    %319 = vrot.lane.b32.xlu0 %v248, 113
    %v320 = vpop.permute.xlu0 %319
    %321 = vrot.lane.b32.xlu0 %v249, 113
    %v322 = vpop.permute.xlu0 %321
    %323 = vrot.lane.b32.xlu0 %v250, 113
    %v324 = vpop.permute.xlu0 %323
    %325 = vrot.lane.b32.xlu0 %v251, 113
    %v326 = vpop.permute.xlu0 %325
    %vm327 = vcmp.lt.s32.totalorder %v261, 113
    %v328 = vsel %vm327, %v324, %v326
    %v329 = vsel %vm327, %v322, %v324
    %v330 = vsel %vm327, %v320, %v322
    %v331 = vsel %vm327, %v326, %v320
    %332 = vrot.lane.b32.xlu0 %v248, 112
    %v333 = vpop.permute.xlu0 %332
    %334 = vrot.lane.b32.xlu0 %v249, 112
    %v335 = vpop.permute.xlu0 %334
    %336 = vrot.lane.b32.xlu0 %v250, 112
    %v337 = vpop.permute.xlu0 %336
    %338 = vrot.lane.b32.xlu0 %v251, 112
    %v339 = vpop.permute.xlu0 %338
    %vm340 = vcmp.lt.s32.totalorder %v261, 112
    %v341 = vsel %vm340, %v337, %v339
    %v342 = vsel %vm340, %v335, %v337
    %v343 = vsel %vm340, %v333, %v335
    %v344 = vsel %vm340, %v339, %v333
    %345 = vrot.lane.b32.xlu0 %v248, 111
    %v346 = vpop.permute.xlu0 %345
    %347 = vrot.lane.b32.xlu0 %v249, 111
    %v348 = vpop.permute.xlu0 %347
    %349 = vrot.lane.b32.xlu0 %v250, 111
    %v350 = vpop.permute.xlu0 %349
    %351 = vrot.lane.b32.xlu0 %v251, 111
    %v352 = vpop.permute.xlu0 %351
    %vm353 = vcmp.lt.s32.totalorder %v261, 111
    %v354 = vsel %vm353, %v350, %v352
    %v355 = vsel %vm353, %v348, %v350
    %v356 = vsel %vm353, %v346, %v348
    %v357 = vsel %vm353, %v352, %v346
    %v358 = vld [vmem:[#allocation2] sm:$0xff]
    %v359 = vld [vmem:[#allocation2 + $0x8] sm:$0xff]
    %v360 = vld [vmem:[#allocation2 + $0x10] sm:$0xff]
    %v361 = vld [vmem:[#allocation2 + $0x18] sm:$0xff]
    %v362 = vld [vmem:[#allocation2 + $0x20] sm:$0xff]
    %v363 = vld [vmem:[#allocation2 + $0x28] sm:$0xff]
    %v364 = vld [vmem:[#allocation2 + $0x30] sm:$0xff]
    %v365 = vld [vmem:[#allocation2 + $0x38] sm:$0xff]
    %v366 = vld [vmem:[#allocation2 + $0x40] sm:$0xff]
    %v367 = vld [vmem:[#allocation2 + $0x48] sm:$0xff]
    %v368 = vld [vmem:[#allocation2 + $0x50] sm:$0xff]
    %v369 = vld [vmem:[#allocation2 + $0x58] sm:$0xff]
    %v370 = vld [vmem:[#allocation2 + $0x60] sm:$0xff]
    %v371 = vld [vmem:[#allocation2 + $0x68] sm:$0xff]
    %v372 = vld [vmem:[#allocation2 + $0x70] sm:$0xff]
    %v373 = vld [vmem:[#allocation2 + $0x78] sm:$0xff]
    %v374 = vld [vmem:[#allocation2 + $0x80] sm:$0xff]
    %v375 = vld [vmem:[#allocation2 + $0x88] sm:$0xff]
    %v376 = vld [vmem:[#allocation2 + $0x90] sm:$0xff]
    %v377 = vld [vmem:[#allocation2 + $0x98] sm:$0xff]
    %v378 = vld [vmem:[#allocation2 + $0xa0] sm:$0xff]
    %v379 = vld [vmem:[#allocation2 + $0xa8] sm:$0xff]
    %v380 = vld [vmem:[#allocation2 + $0xb0] sm:$0xff]
    %v381 = vld [vmem:[#allocation2 + $0xb8] sm:$0xff]
    %v382 = vld [vmem:[#allocation2 + $0xc0] sm:$0xff]
    %v383 = vld [vmem:[#allocation2 + $0xc8] sm:$0xff]
    %v384 = vld [vmem:[#allocation2 + $0xd0] sm:$0xff]
    %v385 = vld [vmem:[#allocation2 + $0xd8] sm:$0xff]
    %v386 = vld [vmem:[#allocation2 + $0xe0] sm:$0xff]
    %v387 = vld [vmem:[#allocation2 + $0xe8] sm:$0xff]
    %v388 = vld [vmem:[#allocation2 + $0xf0] sm:$0xff]
    %v389 = vld [vmem:[#allocation2 + $0xf8] sm:$0xff]
    %v390 = vld [vmem:[#allocation2 + $0x100] sm:$0xff]
    %v391 = vld [vmem:[#allocation2 + $0x108] sm:$0xff]
    %v392 = vld [vmem:[#allocation2 + $0x110] sm:$0xff]
    %v393 = vld [vmem:[#allocation2 + $0x118] sm:$0xff]
    %v394 = vmul.f32 %v266, %v358
    %v395 = vmul.f32 %v265, %v359
    %v396 = vmul.f32 %v264, %v360
    %v397 = vmul.f32 %v263, %v361
    %v398 = vmul.f32 %v279, %v362
    %v399 = vmul.f32 %v278, %v363
    %v400 = vmul.f32 %v277, %v364
    %v401 = vmul.f32 %v276, %v365
    %v402 = vmul.f32 %v292, %v366
    %v403 = vmul.f32 %v291, %v367
    %v404 = vmul.f32 %v290, %v368
    %v405 = vmul.f32 %v289, %v369
    %v406 = vmul.f32 %v305, %v370
    %v407 = vmul.f32 %v304, %v371
    %v408 = vmul.f32 %v303, %v372
    %v409 = vmul.f32 %v302, %v373
    %v410 = vmul.f32 %v248, %v374
    %v411 = vmul.f32 %v249, %v375
    %v412 = vmul.f32 %v250, %v376
    %v413 = vmul.f32 %v251, %v377
    %v414 = vmul.f32 %v317, %v378
    %v415 = vmul.f32 %v316, %v379
    %v416 = vmul.f32 %v315, %v380
    %v417 = vmul.f32 %v318, %v381
    %v418 = vmul.f32 %v330, %v382
    %v419 = vmul.f32 %v329, %v383
    %v420 = vmul.f32 %v328, %v384
    %v421 = vmul.f32 %v331, %v385
    %v422 = vmul.f32 %v343, %v386
    %v423 = vmul.f32 %v342, %v387
    %v424 = vmul.f32 %v341, %v388
    %v425 = vmul.f32 %v344, %v389
    %v426 = vmul.f32 %v356, %v390
    %v427 = vmul.f32 %v355, %v391
    %v428 = vmul.f32 %v354, %v392
    %v429 = vmul.f32 %v357, %v393
    %v430 = vpack.c.bf16 %v398, %v394
    %v431 = vpack.c.bf16 %v399, %v395
    %v432 = vpack.c.bf16 %v400, %v396
    %v433 = vpack.c.bf16 %v401, %v397
    %v434 = vpack.c.bf16 %v406, %v402
    %v435 = vpack.c.bf16 %v407, %v403
    %v436 = vpack.c.bf16 %v408, %v404
    %v437 = vpack.c.bf16 %v409, %v405
    %v438 = vpack.c.bf16 %v414, %v410
    %v439 = vpack.c.bf16 %v415, %v411
    %v440 = vpack.c.bf16 %v416, %v412
    %v441 = vpack.c.bf16 %v417, %v413
    %v442 = vpack.c.bf16 %v422, %v418
    %v443 = vpack.c.bf16 %v423, %v419
    %v444 = vpack.c.bf16 %v424, %v420
    %v445 = vpack.c.bf16 %v425, %v421
    %v446 = vpack.c.bf16 %v426, %v426
    %v447 = vpack.c.bf16 %v427, %v427
    %v448 = vpack.c.bf16 %v428, %v428
    %v449 = vpack.c.bf16 %v429, %v429
    %v450 = vld [vmem:[%s2] sm:$0x3]
    %452 = vset.pattern.permute.xlu0 13
    %453 = vperm.xlu0 %452, %v76
    %v454 = vpop.permute.xlu0 %453
    %vm456 = vcmask 588800
    %v458 = vsel %vm456, %v450, 0
    %v461 = vsel %vm85, %v446, 0
    %v464 = vsel %vm85, %v447, 0
    %v467 = vsel %vm85, %v448, 0
    %v470 = vsel %vm85, %v449, 0
    %472 = vmatprep.subr.bf16.mxu0 %v431
    %473 = vmatpush1.bf16.msra.mxu0 %v430
    %474 = vmatprep.subr.bf16.mxu0 %v435
    %475 = vmatpush1.bf16.msra.mxu0 %v434
    %476 = vmatprep.subr.bf16.mxu0 %v439
    %477 = vmatpush1.bf16.msra.mxu0 %v438
    %478 = vmatprep.subr.bf16.mxu0 %v443
    %479 = vmatpush1.bf16.msra.mxu0 %v442
    %480 = vmatprep.subr.bf16.mxu0 %v464
    %481 = vmatpush1.bf16.msra.mxu0 %v461
    %482 = vmatprep.subr.bf16.mxu0 0
    %483 = vmatpush1.bf16.msra.mxu0 0
    %484 = vmatprep.subr.bf16.mxu0 0
    %485 = vmatpush1.bf16.msra.mxu0 0
    %486 = vmatprep.subr.bf16.mxu0 0
    %487 = vmatpush1.bf16.msra.mxu0 0
    %488 = vmatprep.subr.bf16.mxu0 0
    %489 = vmatpush1.bf16.msra.mxu0 0
    %490 = vmatprep.subr.bf16.mxu0 0
    %491 = vmatpush1.bf16.msra.mxu0 0
    %492 = vmatprep.subr.bf16.mxu0 0
    %493 = vmatpush1.bf16.msra.mxu0 0
    %494 = vmatprep.subr.bf16.mxu0 0
    %495 = vmatpush1.bf16.msra.mxu0 0
    %496 = vmatprep.subr.bf16.mxu0 0
    %497 = vmatpush1.bf16.msra.mxu0 0
    %498 = vmatprep.subr.bf16.mxu0 0
    %499 = vmatpush1.bf16.msra.mxu0 0
    %500 = vmatprep.subr.bf16.mxu0 0
    %501 = vmatpush1.bf16.msra.mxu0 0
    %502 = vmatprep.subr.bf16.mxu0 0
    %503 = vmatpush1.bf16.msra.mxu0 0
    %504 = vmatprep.mubr.bf16.mxu0 0
    %505 = vmatmul.mubr.bf16.gmra.mrb[0].mxu0 %v458
    %v506 = vpop.f32.mrb[0].mxu0
    %v507 = vadd.f32 %v454, %v506
    %v508 = vpop.f32.mrb[0].mxu0
    %v509 = vadd.f32 %v454, %v508
    %v510 = vpop.f32.mrb[0].mxu0
    %v511 = vpop.f32.mrb[0].mxu0
    %512 = vdwg.mxu0
    %513 = vmatprep.subr.bf16.mxu0 %v433
    %514 = vmatpush1.bf16.msra.mxu0 %v432
    %515 = vmatprep.subr.bf16.mxu0 %v437
    %516 = vmatpush1.bf16.msra.mxu0 %v436
    %517 = vmatprep.subr.bf16.mxu0 %v441
    %518 = vmatpush1.bf16.msra.mxu0 %v440
    %519 = vmatprep.subr.bf16.mxu0 %v445
    %520 = vmatpush1.bf16.msra.mxu0 %v444
    %521 = vmatprep.subr.bf16.mxu0 %v470
    %522 = vmatpush1.bf16.msra.mxu0 %v467
    %523 = vmatprep.subr.bf16.mxu0 0
    %524 = vmatpush1.bf16.msra.mxu0 0
    %525 = vmatprep.subr.bf16.mxu0 0
    %526 = vmatpush1.bf16.msra.mxu0 0
    %527 = vmatprep.subr.bf16.mxu0 0
    %528 = vmatpush1.bf16.msra.mxu0 0
    %529 = vmatprep.subr.bf16.mxu0 0
    %530 = vmatpush1.bf16.msra.mxu0 0
    %531 = vmatprep.subr.bf16.mxu0 0
    %532 = vmatpush1.bf16.msra.mxu0 0
    %533 = vmatprep.subr.bf16.mxu0 0
    %534 = vmatpush1.bf16.msra.mxu0 0
    %535 = vmatprep.subr.bf16.mxu0 0
    %536 = vmatpush1.bf16.msra.mxu0 0
    %537 = vmatprep.subr.bf16.mxu0 0
    %538 = vmatpush1.bf16.msra.mxu0 0
    %539 = vmatprep.subr.bf16.mxu0 0
    %540 = vmatpush1.bf16.msra.mxu0 0
    %541 = vmatprep.subr.bf16.mxu0 0
    %542 = vmatpush1.bf16.msra.mxu0 0
    %543 = vmatprep.subr.bf16.mxu0 0
    %544 = vmatpush1.bf16.msra.mxu0 0
    %545 = vmatprep.mubr.bf16.mxu0 0
    %546 = vmatmul.mubr.bf16.gmra.mrb[0].mxu0 %v458
    %v547 = vpop.f32.mrb[0].mxu0
    %v548 = vadd.f32 %v454, %v547
    %v549 = vpop.f32.mrb[0].mxu0
    %v550 = vadd.f32 %v454, %v549
    %v551 = vpop.f32.mrb[0].mxu0
    %v552 = vpop.f32.mrb[0].mxu0
    %553 = vdwg.mxu0
    %v554 = vmul.f32 %v507, 0.5
    %v555 = vmul.f32 %v509, 0.5
    %v556 = vmul.f32 %v548, 0.5
    %v557 = vmul.f32 %v550, 0.5
    %v558 = vtanh.pop %v554
    %v559 = vtanh.pop %v555
    %v560 = vtanh.pop %v556
    %v561 = vtanh.pop %v557
    %v562 = vadd.f32 %v558, 1.0
    %v563 = vadd.f32 %v559, 1.0
    %v564 = vadd.f32 %v560, 1.0
    %v565 = vadd.f32 %v561, 1.0
    %v566 = vmul.f32 %v554, %v562
    %v567 = vmul.f32 %v555, %v563
    %v568 = vmul.f32 %v556, %v564
    %v569 = vmul.f32 %v557, %v565
    %v570 = vld [vmem:[#allocation4] sm:$0xff]
    %v571 = vld [vmem:[#allocation4 + $0x8] sm:$0xff]
    %v572 = vld [vmem:[#allocation4 + $0x10] sm:$0xff]
    %v573 = vld [vmem:[#allocation4 + $0x18] sm:$0xff]
    %v574 = vld [vmem:[#allocation4 + $0x20] sm:$0xff]
    %v575 = vld [vmem:[#allocation4 + $0x28] sm:$0xff]
    %v576 = vld [vmem:[#allocation4 + $0x30] sm:$0xff]
    %v577 = vld [vmem:[#allocation4 + $0x38] sm:$0xff]
    %v578 = vld [vmem:[#allocation4 + $0x40] sm:$0xff]
    %v579 = vld [vmem:[#allocation4 + $0x48] sm:$0xff]
    %v580 = vld [vmem:[#allocation4 + $0x50] sm:$0xff]
    %v581 = vld [vmem:[#allocation4 + $0x58] sm:$0xff]
    %v582 = vld [vmem:[#allocation4 + $0x60] sm:$0xff]
    %v583 = vld [vmem:[#allocation4 + $0x68] sm:$0xff]
    %v584 = vld [vmem:[#allocation4 + $0x70] sm:$0xff]
    %v585 = vld [vmem:[#allocation4 + $0x78] sm:$0xff]
    %v586 = vld [vmem:[#allocation4 + $0x80] sm:$0xff]
    %v587 = vld [vmem:[#allocation4 + $0x88] sm:$0xff]
    %v588 = vld [vmem:[#allocation4 + $0x90] sm:$0xff]
    %v589 = vld [vmem:[#allocation4 + $0x98] sm:$0xff]
    %v590 = vld [vmem:[#allocation4 + $0xa0] sm:$0xff]
    %v591 = vld [vmem:[#allocation4 + $0xa8] sm:$0xff]
    %v592 = vld [vmem:[#allocation4 + $0xb0] sm:$0xff]
    %v593 = vld [vmem:[#allocation4 + $0xb8] sm:$0xff]
    %v594 = vld [vmem:[#allocation4 + $0xc0] sm:$0xff]
    %v595 = vld [vmem:[#allocation4 + $0xc8] sm:$0xff]
    %v596 = vld [vmem:[#allocation4 + $0xd0] sm:$0xff]
    %v597 = vld [vmem:[#allocation4 + $0xd8] sm:$0xff]
    %v598 = vld [vmem:[#allocation4 + $0xe0] sm:$0xff]
    %v599 = vld [vmem:[#allocation4 + $0xe8] sm:$0xff]
    %v600 = vld [vmem:[#allocation4 + $0xf0] sm:$0xff]
    %v601 = vld [vmem:[#allocation4 + $0xf8] sm:$0xff]
    %v602 = vld [vmem:[#allocation4 + $0x100] sm:$0xff]
    %v603 = vld [vmem:[#allocation4 + $0x108] sm:$0xff]
    %v604 = vld [vmem:[#allocation4 + $0x110] sm:$0xff]
    %v605 = vld [vmem:[#allocation4 + $0x118] sm:$0xff]
    %v606 = vld [vmem:[#allocation4 + $0x120] sm:$0xff]
    %v607 = vld [vmem:[#allocation4 + $0x128] sm:$0xff]
    %v608 = vld [vmem:[#allocation4 + $0x130] sm:$0xff]
    %v609 = vld [vmem:[#allocation4 + $0x138] sm:$0xff]
    %v610 = vld [vmem:[#allocation4 + $0x140] sm:$0xff]
    %v611 = vld [vmem:[#allocation4 + $0x148] sm:$0xff]
    %v612 = vld [vmem:[#allocation4 + $0x150] sm:$0xff]
    %v613 = vld [vmem:[#allocation4 + $0x158] sm:$0xff]
    %v614 = vld [vmem:[#allocation4 + $0x160] sm:$0xff]
    %v615 = vld [vmem:[#allocation4 + $0x168] sm:$0xff]
    %v616 = vld [vmem:[#allocation4 + $0x170] sm:$0xff]
    %v617 = vld [vmem:[#allocation4 + $0x178] sm:$0xff]
    %v618 = vld [vmem:[#allocation4 + $0x180] sm:$0xff]
    %v619 = vld [vmem:[#allocation4 + $0x188] sm:$0xff]
    %v620 = vld [vmem:[#allocation4 + $0x190] sm:$0xff]
    %v621 = vld [vmem:[#allocation4 + $0x198] sm:$0xff]
    %v622 = vld [vmem:[#allocation4 + $0x1a0] sm:$0xff]
    %v623 = vld [vmem:[#allocation4 + $0x1a8] sm:$0xff]
    %v624 = vld [vmem:[#allocation4 + $0x1b0] sm:$0xff]
    %v625 = vld [vmem:[#allocation4 + $0x1b8] sm:$0xff]
    %v626 = vld [vmem:[#allocation4 + $0x1c0] sm:$0xff]
    %v627 = vld [vmem:[#allocation4 + $0x1c8] sm:$0xff]
    %v628 = vld [vmem:[#allocation4 + $0x1d0] sm:$0xff]
    %v629 = vld [vmem:[#allocation4 + $0x1d8] sm:$0xff]
    %v630 = vld [vmem:[#allocation4 + $0x1e0] sm:$0xff]
    %v631 = vld [vmem:[#allocation4 + $0x1e8] sm:$0xff]
    %v632 = vld [vmem:[#allocation4 + $0x1f0] sm:$0xff]
    %v633 = vld [vmem:[#allocation4 + $0x1f8] sm:$0xff]
    %634 = vmatprep.subr.mxu0 0.0
    %635 = vmatpush1.msra.mxu0 %v570
    %636 = vmatprep.subr.mxu0 0.0
    %637 = vmatpush1.msra.mxu0 %v571
    %638 = vmatprep.subr.mxu0 0.0
    %639 = vmatpush1.msra.mxu0 %v572
    %640 = vmatprep.subr.mxu0 0.0
    %641 = vmatpush1.msra.mxu0 %v573
    %642 = vmatprep.subr.mxu0 0.0
    %643 = vmatpush1.msra.mxu0 %v574
    %644 = vmatprep.subr.mxu0 0.0
    %645 = vmatpush1.msra.mxu0 %v575
    %646 = vmatprep.subr.mxu0 0.0
    %647 = vmatpush1.msra.mxu0 %v576
    %648 = vmatprep.subr.mxu0 0.0
    %649 = vmatpush1.msra.mxu0 %v577
    %650 = vmatprep.subr.mxu0 0.0
    %651 = vmatpush1.msra.mxu0 %v578
    %652 = vmatprep.subr.mxu0 0.0
    %653 = vmatpush1.msra.mxu0 %v579
    %654 = vmatprep.subr.mxu0 0.0
    %655 = vmatpush1.msra.mxu0 %v580
    %656 = vmatprep.subr.mxu0 0.0
    %657 = vmatpush1.msra.mxu0 %v581
    %658 = vmatprep.subr.mxu0 0.0
    %659 = vmatpush1.msra.mxu0 %v582
    %660 = vmatprep.subr.mxu0 0.0
    %661 = vmatpush1.msra.mxu0 %v583
    %662 = vmatprep.subr.mxu0 0.0
    %663 = vmatpush1.msra.mxu0 %v584
    %664 = vmatprep.subr.mxu0 0.0
    %665 = vmatpush1.msra.mxu0 %v585
    %666 = vmatprep.subr.mxu0 0.0
    %667 = vmatpush1.msra.mxu0 %v586
    %668 = vmatprep.subr.mxu0 0.0
    %669 = vmatpush1.msra.mxu0 %v587
    %670 = vmatprep.subr.mxu0 0.0
    %671 = vmatpush1.msra.mxu0 %v588
    %672 = vmatprep.subr.mxu0 0.0
    %673 = vmatpush1.msra.mxu0 %v589
    %674 = vmatprep.subr.mxu0 0.0
    %675 = vmatpush1.msra.mxu0 %v590
    %676 = vmatprep.subr.mxu0 0.0
    %677 = vmatpush1.msra.mxu0 %v591
    %678 = vmatprep.subr.mxu0 0.0
    %679 = vmatpush1.msra.mxu0 %v592
    %680 = vmatprep.subr.mxu0 0.0
    %681 = vmatpush1.msra.mxu0 %v593
    %682 = vmatprep.subr.mxu0 0.0
    %683 = vmatpush1.msra.mxu0 %v594
    %684 = vmatprep.subr.mxu0 0.0
    %685 = vmatpush1.msra.mxu0 %v595
    %686 = vmatprep.subr.mxu0 0.0
    %687 = vmatpush1.msra.mxu0 %v596
    %688 = vmatprep.subr.mxu0 0.0
    %689 = vmatpush1.msra.mxu0 %v597
    %690 = vmatprep.subr.mxu0 0.0
    %691 = vmatpush1.msra.mxu0 %v598
    %692 = vmatprep.subr.mxu0 0.0
    %693 = vmatpush1.msra.mxu0 %v599
    %694 = vmatprep.subr.mxu0 0.0
    %695 = vmatpush1.msra.mxu0 %v600
    %696 = vmatprep.subr.mxu0 0.0
    %697 = vmatpush1.msra.mxu0 %v601
    %698 = vmatprep.mubr.f32.mxu0 %v69
    %699 = vmatmul.mubr.f32.gmra.mrb[0].mxu0 %v65
    %v700 = vpop.f32.mrb[0].mxu0
    %v701 = vadd.f32 0.0, %v700
    %v702 = vpop.f32.mrb[0].mxu0
    %703 = vdwg.mxu0
    %704 = vmatprep.subr.mxu0 0.0
    %705 = vmatpush1.msra.mxu0 %v602
    %706 = vmatprep.subr.mxu0 0.0
    %707 = vmatpush1.msra.mxu0 %v603
    %708 = vmatprep.subr.mxu0 0.0
    %709 = vmatpush1.msra.mxu0 %v604
    %710 = vmatprep.subr.mxu0 0.0
    %711 = vmatpush1.msra.mxu0 %v605
    %712 = vmatprep.subr.mxu0 0.0
    %713 = vmatpush1.msra.mxu0 %v606
    %714 = vmatprep.subr.mxu0 0.0
    %715 = vmatpush1.msra.mxu0 %v607
    %716 = vmatprep.subr.mxu0 0.0
    %717 = vmatpush1.msra.mxu0 %v608
    %718 = vmatprep.subr.mxu0 0.0
    %719 = vmatpush1.msra.mxu0 %v609
    %720 = vmatprep.subr.mxu0 0.0
    %721 = vmatpush1.msra.mxu0 %v610
    %722 = vmatprep.subr.mxu0 0.0
    %723 = vmatpush1.msra.mxu0 %v611
    %724 = vmatprep.subr.mxu0 0.0
    %725 = vmatpush1.msra.mxu0 %v612
    %726 = vmatprep.subr.mxu0 0.0
    %727 = vmatpush1.msra.mxu0 %v613
    %728 = vmatprep.subr.mxu0 0.0
    %729 = vmatpush1.msra.mxu0 %v614
    %730 = vmatprep.subr.mxu0 0.0
    %731 = vmatpush1.msra.mxu0 %v615
    %732 = vmatprep.subr.mxu0 0.0
    %733 = vmatpush1.msra.mxu0 %v616
    %734 = vmatprep.subr.mxu0 0.0
    %735 = vmatpush1.msra.mxu0 %v617
    %736 = vmatprep.subr.mxu0 0.0
    %737 = vmatpush1.msra.mxu0 %v618
    %738 = vmatprep.subr.mxu0 0.0
    %739 = vmatpush1.msra.mxu0 %v619
    %740 = vmatprep.subr.mxu0 0.0
    %741 = vmatpush1.msra.mxu0 %v620
    %742 = vmatprep.subr.mxu0 0.0
    %743 = vmatpush1.msra.mxu0 %v621
    %744 = vmatprep.subr.mxu0 0.0
    %745 = vmatpush1.msra.mxu0 %v622
    %746 = vmatprep.subr.mxu0 0.0
    %747 = vmatpush1.msra.mxu0 %v623
    %748 = vmatprep.subr.mxu0 0.0
    %749 = vmatpush1.msra.mxu0 %v624
    %750 = vmatprep.subr.mxu0 0.0
    %751 = vmatpush1.msra.mxu0 %v625
    %752 = vmatprep.subr.mxu0 0.0
    %753 = vmatpush1.msra.mxu0 %v626
    %754 = vmatprep.subr.mxu0 0.0
    %755 = vmatpush1.msra.mxu0 %v627
    %756 = vmatprep.subr.mxu0 0.0
    %757 = vmatpush1.msra.mxu0 %v628
    %758 = vmatprep.subr.mxu0 0.0
    %759 = vmatpush1.msra.mxu0 %v629
    %760 = vmatprep.subr.mxu0 0.0
    %761 = vmatpush1.msra.mxu0 %v630
    %762 = vmatprep.subr.mxu0 0.0
    %763 = vmatpush1.msra.mxu0 %v631
    %764 = vmatprep.subr.mxu0 0.0
    %765 = vmatpush1.msra.mxu0 %v632
    %766 = vmatprep.subr.mxu0 0.0
    %767 = vmatpush1.msra.mxu0 %v633
    %768 = vmatprep.mubr.f32.mxu0 %v72
    %769 = vmatmul.mubr.f32.gmra.mrb[0].mxu0 %v67
    %v770 = vpop.f32.mrb[0].mxu0
    %v771 = vadd.f32 %v701, %v770
    %v772 = vpop.f32.mrb[0].mxu0
    %773 = vdwg.mxu0
    %775 = vset.pattern.permute.xlu0 4
    %776 = vperm.xlu0 %775, %v75
    %v777 = vpop.permute.xlu0 %776
    %v779 = vlaneseq
    %v780 = vshrl.u32 %v779, 7
    %v781 = vsub.s32 0, %v780
    %v782 = vrot.slane %v771, %v781
    %v783 = vmul.f32 %v777, %v782
    %784 = vset.pattern.permute.xlu0 5
    %785 = vperm.xlu0 %784, %v75
    %v786 = vpop.permute.xlu0 %785
    %v788 = vlaneseq
    %v789 = vshrl.u32 %v788, 7
    %v790 = vsub.s32 1, %v789
    %v791 = vrot.slane %v771, %v790
    %v792 = vmul.f32 %v786, %v791
    %v793 = vadd.f32 %v783, %v792
    %794 = vset.pattern.permute.xlu0 6
    %795 = vperm.xlu0 %794, %v75
    %v796 = vpop.permute.xlu0 %795
    %v798 = vlaneseq
    %v799 = vshrl.u32 %v798, 7
    %v800 = vsub.s32 2, %v799
    %v801 = vrot.slane %v771, %v800
    %v802 = vmul.f32 %v796, %v801
    %v803 = vadd.f32 %v793, %v802
    %804 = vset.pattern.permute.xlu0 7
    %805 = vperm.xlu0 %804, %v75
    %v806 = vpop.permute.xlu0 %805
    %v808 = vlaneseq
    %v809 = vshrl.u32 %v808, 7
    %v810 = vsub.s32 3, %v809
    %v811 = vrot.slane %v771, %v810
    %v812 = vmul.f32 %v806, %v811
    %v813 = vadd.f32 %v803, %v812
    %814 = vset.pattern.permute.xlu0 11
    %815 = vperm.xlu0 %814, %v75
    %v816 = vpop.permute.xlu0 %815
    %v818 = vadd.f32 %v813, %v816
    %vm819 = vcmp.gt.f32.partialorder %v818, 0.0
    %820 = vset.pattern.permute.xlu0 12
    %821 = vperm.xlu0 %820, %v75
    %v822 = vpop.permute.xlu0 %821
    %v824 = vmul.f32 %v822, %v818
    %v825 = vsel %vm819, %v818, %v824
    %826 = vset.pattern.permute.xlu0 8
    %827 = vperm.xlu0 %826, %v76
    %v828 = vpop.permute.xlu0 %827
    %v830 = vlaneseq
    %v831 = vshrl.u32 %v830, 7
    %v832 = vsub.s32 0, %v831
    %v833 = vrot.slane %v825, %v832
    %v834 = vmul.f32 %v828, %v833
    %835 = vset.pattern.permute.xlu0 9
    %836 = vperm.xlu0 %835, %v76
    %v837 = vpop.permute.xlu0 %836
    %v839 = vlaneseq
    %v840 = vshrl.u32 %v839, 7
    %v841 = vsub.s32 1, %v840
    %v842 = vrot.slane %v825, %v841
    %v843 = vmul.f32 %v837, %v842
    %v844 = vadd.f32 %v834, %v843
    %845 = vset.pattern.permute.xlu0 14
    %846 = vperm.xlu0 %845, %v76
    %v847 = vpop.permute.xlu0 %846
    %v849 = vadd.f32 %v844, %v847
    %vm850 = vcmp.gt.f32.partialorder %v849, 0.0
    %851 = vset.pattern.permute.xlu0 15
    %852 = vperm.xlu0 %851, %v76
    %v853 = vpop.permute.xlu0 %852
    %v855 = vmul.f32 %v853, %v849
    %v856 = vsel %vm850, %v849, %v855
    %vm857 = vcmask 404480
    %v858 = vsel %vm857, %v856, -inf
    %v859 = vrot.slane %v858, 4
    %v860 = vmax.f32 %v858, %v859
    %v861 = vrot.slane %v860, 2
    %v862 = vmax.f32 %v860, %v861
    %v863 = vrot.slane %v862, 1
    %v864 = vmax.f32 %v862, %v863
    %v865 = vsub.f32 %v856, %v864
    %v866 = vmul.f32 %v865, 1.442695
    %v867 = vpow.pop %v866
    %v868 = vsel %vm857, %v867, 0.0
    %v869 = vrot.slane %v868, 4
    %v870 = vadd.f32 %v868, %v869
    %v871 = vrot.slane %v870, 2
    %v872 = vadd.f32 %v870, %v871
    %v873 = vrot.slane %v872, 1
    %v874 = vadd.f32 %v872, %v873
    %v875 = vrcp.pop %v874
    %v876 = vmul.f32 %v867, %v875
    %v877 = vld [vmem:[#allocation6] sm:$0xff]
    %v878 = vld [vmem:[#allocation6 + $0x8] sm:$0xff]
    %v879 = vld [vmem:[#allocation6 + $0x10] sm:$0xff]
    %v880 = vld [vmem:[#allocation6 + $0x18] sm:$0xff]
    %v881 = vld [vmem:[#allocation6 + $0x20] sm:$0xff]
    %v882 = vld [vmem:[#allocation6 + $0x28] sm:$0xff]
    %v883 = vld [vmem:[#allocation6 + $0x30] sm:$0xff]
    %v884 = vld [vmem:[#allocation6 + $0x38] sm:$0xff]
    %v885 = vld [vmem:[#allocation6 + $0x40] sm:$0xff]
    %v886 = vld [vmem:[#allocation6 + $0x48] sm:$0xff]
    %v887 = vld [vmem:[#allocation6 + $0x50] sm:$0xff]
    %v888 = vld [vmem:[#allocation6 + $0x58] sm:$0xff]
    %v889 = vld [vmem:[#allocation6 + $0x60] sm:$0xff]
    %v890 = vld [vmem:[#allocation6 + $0x68] sm:$0xff]
    %v891 = vld [vmem:[#allocation6 + $0x70] sm:$0xff]
    %v892 = vld [vmem:[#allocation6 + $0x78] sm:$0xff]
    %v893 = vld [vmem:[#allocation6 + $0x80] sm:$0xff]
    %v894 = vld [vmem:[#allocation6 + $0x88] sm:$0xff]
    %v895 = vld [vmem:[#allocation6 + $0x90] sm:$0xff]
    %v896 = vld [vmem:[#allocation6 + $0x98] sm:$0xff]
    %v897 = vld [vmem:[#allocation6 + $0xa0] sm:$0xff]
    %v898 = vld [vmem:[#allocation6 + $0xa8] sm:$0xff]
    %v899 = vld [vmem:[#allocation6 + $0xb0] sm:$0xff]
    %v900 = vld [vmem:[#allocation6 + $0xb8] sm:$0xff]
    %v901 = vld [vmem:[#allocation6 + $0xc0] sm:$0x3]
    %v902 = vld [vmem:[#allocation6 + $0xc8] sm:$0x3]
    %v903 = vld [vmem:[#allocation6 + $0xd0] sm:$0x3]
    %v904 = vld [vmem:[#allocation6 + $0xd8] sm:$0x3]
    %vm905 = vcmask 408576
    %v907 = vsel %vm905, %v876, 0
    %vm909 = vcmask 1041408
    %v911 = vsel %vm909, %v901, 0
    %v914 = vsel %vm909, %v902, 0
    %v917 = vsel %vm909, %v903, 0
    %v920 = vsel %vm909, %v904, 0
    %922 = vmatprep.subr.mxu0 %v878
    %923 = vmatpush1.msra.mxu0 %v877
    %924 = vmatprep.subr.mxu0 %v882
    %925 = vmatpush1.msra.mxu0 %v881
    %926 = vmatprep.subr.mxu0 %v886
    %927 = vmatpush1.msra.mxu0 %v885
    %928 = vmatprep.subr.mxu0 %v890
    %929 = vmatpush1.msra.mxu0 %v889
    %930 = vmatprep.subr.mxu0 %v894
    %931 = vmatpush1.msra.mxu0 %v893
    %932 = vmatprep.subr.mxu0 %v898
    %933 = vmatpush1.msra.mxu0 %v897
    %934 = vmatprep.subr.mxu0 %v914
    %935 = vmatpush1.msra.mxu0 %v911
    %936 = vmatprep.subr.mxu0 0.0
    %937 = vmatpush1.msra.mxu0 0.0
    %938 = vmatprep.subr.mxu0 0.0
    %939 = vmatpush1.msra.mxu0 0.0
    %940 = vmatprep.subr.mxu0 0.0
    %941 = vmatpush1.msra.mxu0 0.0
    %942 = vmatprep.subr.mxu0 0.0
    %943 = vmatpush1.msra.mxu0 0.0
    %944 = vmatprep.subr.mxu0 0.0
    %945 = vmatpush1.msra.mxu0 0.0
    %946 = vmatprep.subr.mxu0 0.0
    %947 = vmatpush1.msra.mxu0 0.0
    %948 = vmatprep.subr.mxu0 0.0
    %949 = vmatpush1.msra.mxu0 0.0
    %950 = vmatprep.subr.mxu0 0.0
    %951 = vmatpush1.msra.mxu0 0.0
    %952 = vmatprep.subr.mxu0 0.0
    %953 = vmatpush1.msra.mxu0 0.0
    %954 = vmatprep.subr.mxu0 0.0
    %955 = vmatpush1.msra.mxu0 0.0
    %956 = vmatprep.subr.mxu0 0.0
    %957 = vmatpush1.msra.mxu0 0.0
    %958 = vmatprep.subr.mxu0 0.0
    %959 = vmatpush1.msra.mxu0 0.0
    %960 = vmatprep.subr.mxu0 0.0
    %961 = vmatpush1.msra.mxu0 0.0
    %962 = vmatprep.subr.mxu0 0.0
    %963 = vmatpush1.msra.mxu0 0.0
    %964 = vmatprep.subr.mxu0 0.0
    %965 = vmatpush1.msra.mxu0 0.0
    %966 = vmatprep.subr.mxu0 0.0
    %967 = vmatpush1.msra.mxu0 0.0
    %968 = vmatprep.subr.mxu0 0.0
    %969 = vmatpush1.msra.mxu0 0.0
    %970 = vmatprep.subr.mxu0 0.0
    %971 = vmatpush1.msra.mxu0 0.0
    %972 = vmatprep.subr.mxu0 0.0
    %973 = vmatpush1.msra.mxu0 0.0
    %974 = vmatprep.subr.mxu0 0.0
    %975 = vmatpush1.msra.mxu0 0.0
    %976 = vmatprep.subr.mxu0 0.0
    %977 = vmatpush1.msra.mxu0 0.0
    %978 = vmatprep.subr.mxu0 0.0
    %979 = vmatpush1.msra.mxu0 0.0
    %980 = vmatprep.subr.mxu0 0.0
    %981 = vmatpush1.msra.mxu0 0.0
    %982 = vmatprep.subr.mxu0 0.0
    %983 = vmatpush1.msra.mxu0 0.0
    %984 = vmatprep.subr.mxu0 0.0
    %985 = vmatpush1.msra.mxu0 0.0
    %986 = vmatprep.mubr.f32.mxu0 0.0
    %987 = vmatmul.mubr.f32.gmra.mrb[0].mxu0 %v907
    %v988 = vpop.f32.mrb[0].mxu0
    %v989 = vadd.f32 0.0, %v988
    %v990 = vpop.f32.mrb[0].mxu0
    %v991 = vadd.f32 0.0, %v990
    %992 = vdwg.mxu0
    %993 = vmatprep.subr.mxu0 %v880
    %994 = vmatpush1.msra.mxu0 %v879
    %995 = vmatprep.subr.mxu0 %v884
    %996 = vmatpush1.msra.mxu0 %v883
    %997 = vmatprep.subr.mxu0 %v888
    %998 = vmatpush1.msra.mxu0 %v887
    %999 = vmatprep.subr.mxu0 %v892
    %1000 = vmatpush1.msra.mxu0 %v891
    %1001 = vmatprep.subr.mxu0 %v896
    %1002 = vmatpush1.msra.mxu0 %v895
    %1003 = vmatprep.subr.mxu0 %v900
    %1004 = vmatpush1.msra.mxu0 %v899
    %1005 = vmatprep.subr.mxu0 %v920
    %1006 = vmatpush1.msra.mxu0 %v917
    %1007 = vmatprep.subr.mxu0 0.0
    %1008 = vmatpush1.msra.mxu0 0.0
    %1009 = vmatprep.subr.mxu0 0.0
    %1010 = vmatpush1.msra.mxu0 0.0
    %1011 = vmatprep.subr.mxu0 0.0
    %1012 = vmatpush1.msra.mxu0 0.0
    %1013 = vmatprep.subr.mxu0 0.0
    %1014 = vmatpush1.msra.mxu0 0.0
    %1015 = vmatprep.subr.mxu0 0.0
    %1016 = vmatpush1.msra.mxu0 0.0
    %1017 = vmatprep.subr.mxu0 0.0
    %1018 = vmatpush1.msra.mxu0 0.0
    %1019 = vmatprep.subr.mxu0 0.0
    %1020 = vmatpush1.msra.mxu0 0.0
    %1021 = vmatprep.subr.mxu0 0.0
    %1022 = vmatpush1.msra.mxu0 0.0
    %1023 = vmatprep.subr.mxu0 0.0
    %1024 = vmatpush1.msra.mxu0 0.0
    %1025 = vmatprep.subr.mxu0 0.0
    %1026 = vmatpush1.msra.mxu0 0.0
    %1027 = vmatprep.subr.mxu0 0.0
    %1028 = vmatpush1.msra.mxu0 0.0
    %1029 = vmatprep.subr.mxu0 0.0
    %1030 = vmatpush1.msra.mxu0 0.0
    %1031 = vmatprep.subr.mxu0 0.0
    %1032 = vmatpush1.msra.mxu0 0.0
    %1033 = vmatprep.subr.mxu0 0.0
    %1034 = vmatpush1.msra.mxu0 0.0
    %1035 = vmatprep.subr.mxu0 0.0
    %1036 = vmatpush1.msra.mxu0 0.0
    %1037 = vmatprep.subr.mxu0 0.0
    %1038 = vmatpush1.msra.mxu0 0.0
    %1039 = vmatprep.subr.mxu0 0.0
    %1040 = vmatpush1.msra.mxu0 0.0
    %1041 = vmatprep.subr.mxu0 0.0
    %1042 = vmatpush1.msra.mxu0 0.0
    %1043 = vmatprep.subr.mxu0 0.0
    %1044 = vmatpush1.msra.mxu0 0.0
    %1045 = vmatprep.subr.mxu0 0.0
    %1046 = vmatpush1.msra.mxu0 0.0
    %1047 = vmatprep.subr.mxu0 0.0
    %1048 = vmatpush1.msra.mxu0 0.0
    %1049 = vmatprep.subr.mxu0 0.0
    %1050 = vmatpush1.msra.mxu0 0.0
    %1051 = vmatprep.subr.mxu0 0.0
    %1052 = vmatpush1.msra.mxu0 0.0
    %1053 = vmatprep.subr.mxu0 0.0
    %1054 = vmatpush1.msra.mxu0 0.0
    %1055 = vmatprep.subr.mxu0 0.0
    %1056 = vmatpush1.msra.mxu0 0.0
    %1057 = vmatprep.mubr.f32.mxu0 0.0
    %1058 = vmatmul.mubr.f32.gmra.mrb[0].mxu0 %v907
    %v1059 = vpop.f32.mrb[0].mxu0
    %v1060 = vadd.f32 0.0, %v1059
    %v1061 = vpop.f32.mrb[0].mxu0
    %v1062 = vadd.f32 0.0, %v1061
    %1063 = vdwg.mxu0
    %v1064 = vmul.f32 %v566, %v989
    %v1065 = vmul.f32 %v567, %v991
    %v1066 = vmul.f32 %v568, %v1060
    %v1067 = vmul.f32 %v569, %v1062
    %v1068 = vadd.f32 %v1064, %v65
    %v1069 = vadd.f32 %v1065, %v69
    %v1070 = vadd.f32 %v1066, %v67
    %v1071 = vadd.f32 %v1067, %v72
    %v1074 = vcombine.low %v1068, %v1069
    %1076 = vst [vmem:[%s6] sm:$0xff] %v1074
    %v1079 = vcombine.low %v1070, %v1071
    %s1081 = scalar_lea.vmem %s6, 8
    %1082 = vst [vmem:[%s1081] sm:$0xff] %v1079
    // Predicated region
    $region38: #{_lambda_.1} parent=1 // pred_check
      _
    $region39: #{_lambda_.1} parent=1 // pred_check_branch
      %1084 = sbr.rel (0) target = $region41
    $region40: #{_lambda_.1} parent=1 // pred_region
      _
    $region41: #{_lambda_.1} parent=1 // pred_fallthru
      _
    // Predicated region
    $region42: #{_lambda_.1} parent=1 // pred_check
      _
    $region43: #{_lambda_.1} parent=1 // pred_check_branch
      %1086 = sbr.rel (0) target = $region45
    $region44: #{_lambda_.1} parent=1 // pred_region
      _
    $region45: #{_lambda_.1} parent=1 // pred_fallthru
      _
    %1087 = vsyncpa [#allocation3], 1
    %1088 = vsyncpa [#allocation5], 1

</llo_original>
